<compile_context>
chip_gen: v6e
topology: v6e:2x2x1
jax: 0.10.0
libtpu: 0.0.40
codegen_flags: <defaults>
</compile_context>

<pallas_src>
import numpy as np
import jax
import jax.numpy as jnp
from jax.experimental import pallas as pl
from jax.experimental.pallas import tpu as pltpu

EPS = 1e-5


def _make_kernel(H):
    def residual_block_kernel(x_ref, w1_ref, w2_ref, wsc_ref,
                              g1_ref, b1_ref, g2_ref, b2_ref, gsc_ref, bsc_ref,
                              gmean_ref, a_ref, out_ref):
        M = x_ref.shape[0]                       # N*H rows, each row = one image line
        x = x_ref[...]                           # (M, W*Cin)  lane-dense f32
        gmean = gmean_ref[...]                   # (W*Cout, W*Cout) f32 group-mean matrix

        # Image-boundary row masks from iota (no VMEM mask inputs / DMAs).
        h = jax.lax.broadcasted_iota(jnp.int32, (M, 1), 0) % H
        not_first = h != 0                       # False where h == 0
        not_last = h != (H - 1)                  # False where h == H-1

        def conv3x3(rows, w3_ref):
            # Vertical taps: XLU roll + select.  Horizontal taps + zero padding
            # are folded into the three (W*Ci, W*Cout) kh-blocks of the banded
            # weight -> three K-aligned bf16 matmuls accumulated in f32.
            up = jnp.where(not_first, pltpu.roll(rows, shift=1, axis=0), 0.0)
            dn = jnp.where(not_last, pltpu.roll(rows, shift=M - 1, axis=0), 0.0)
            acc = jnp.dot(up.astype(jnp.bfloat16), w3_ref[0],
                          preferred_element_type=jnp.float32)
            acc += jnp.dot(rows.astype(jnp.bfloat16), w3_ref[1],
                           preferred_element_type=jnp.float32)
            acc += jnp.dot(dn.astype(jnp.bfloat16), w3_ref[2],
                           preferred_element_type=jnp.float32)
            return acc

        def bn(y, gamma_row, beta_row):
            # One-pass training-mode BN (biased variance), f32 throughout.
            # Stacked (2, W*Cout) stats hit the group-mean matrix with ONE
            # matmul, which both averages per channel and re-broadcasts the
            # result back to the lane-dense layout.
            s1 = jnp.sum(y, axis=0, keepdims=True)              # (1, W*Cout)
            s2 = jnp.sum(y * y, axis=0, keepdims=True)          # (1, W*Cout)
            stats = jnp.dot(jnp.concatenate([s1, s2], axis=0), gmean,
                            preferred_element_type=jnp.float32)  # (2, W*Cout)
            mean = stats[0:1, :]
            var = stats[1:2, :] - mean * mean
            scale = gamma_row * jax.lax.rsqrt(var + EPS)
            return y * scale + (beta_row - mean * scale)

        # ---- left branch ----
        y = bn(conv3x3(x, w1_ref), g1_ref[...], b1_ref[...])
        alpha = a_ref[0]                                        # PReLU shared param (SMEM)
        y = jnp.where(y > 0, y, alpha * y)
        left = bn(conv3x3(y, w2_ref), g2_ref[...], b2_ref[...])

        # ---- shortcut: 1x1 projection conv reuses x's row slab (center tap) ----
        sc = bn(jnp.dot(x.astype(jnp.bfloat16), wsc_ref[...],
                        preferred_element_type=jnp.float32),
                gsc_ref[...], bsc_ref[...])

        # ---- residual add + ReLU, lane-dense (128-wide) store ----
        out_ref[...] = jnp.maximum(left + sc, 0.0)

    return residual_block_kernel


# ---------------------------------------------------------------------------
# Wrapper-side precomputation (weights reshaped once, outside the kernel).
# ---------------------------------------------------------------------------
def _banded_conv3x3_weight(w9, Wdim):
    """(9, Ci, Co) taps -> stacked kh-blocks (3, Wdim*Ci, Wdim*Co) in bf16.

    Within a block, row = w_in*Ci + ci, column = w_out*Co + co.  Entries outside
    the image (horizontal zero padding) are simply absent (zero)."""
    _, Ci, Co = w9.shape
    wk = w9.reshape(3, 3, Ci, Co)
    sel = np.zeros((3, Wdim, Wdim), np.float32)            # sel[kw, w_in, w_out]
    for kw in range(3):
        for wout in range(Wdim):
            win = wout + kw - 1
            if 0 <= win < Wdim:
                sel[kw, win, wout] = 1.0
    big = jnp.einsum("hwio,wab->haibo", wk, jnp.asarray(sel))
    return big.reshape(3, Wdim * Ci, Wdim * Co).astype(jnp.bfloat16)


def _blockdiag_1x1_weight(wsc, Wdim):
    Ci, Co = wsc.shape
    eye = jnp.asarray(np.eye(Wdim, dtype=np.float32))
    big = jnp.einsum("io,ab->aibo", wsc, eye)
    return big.reshape(Wdim * Ci, Wdim * Co).astype(jnp.bfloat16)


def _group_mean_matrix(Wdim, Co, count):
    """G[w*Co+c, w2*Co+c2] = 1/count if c == c2 else 0 (per-channel mean via MXU)."""
    g = np.zeros((Wdim * Co, Wdim * Co), np.float32)
    for c in range(Co):
        idx = np.arange(Wdim) * Co + c
        g[np.ix_(idx, idx)] = 1.0 / count
    return jnp.asarray(g)


def residual_block(x_nchw, params, stride=1):
    assert stride == 1   # TODO(synk): see stride>1 note at top of file.
    (w1, g1, b1, w2, g2, b2, wsc, gsc, bsc, a) = params
    N, Cin, H, W = x_nchw.shape
    Cout = w1.shape[-1]
    M = N * H

    # Channels-last row layout: row r = (n, h), column index = w*C + c.
    x_rows = jnp.transpose(x_nchw, (0, 2, 3, 1)).astype(jnp.float32).reshape(M, W * Cin)

    w1big = _banded_conv3x3_weight(w1.astype(jnp.float32), W)   # (3, W*Cin,  W*Cout) bf16
    w2big = _banded_conv3x3_weight(w2.astype(jnp.float32), W)   # (3, W*Cout, W*Cout) bf16
    wscbig = _blockdiag_1x1_weight(wsc.astype(jnp.float32), W)  # (W*Cin,     W*Cout) bf16
    gmean = _group_mean_matrix(W, Cout, N * H * W)              # (W*Cout,    W*Cout) f32

    def tile_row(p):   # (1, Cout) -> lane-dense (1, W*Cout): col w*Cout+c -> p[c]
        return jnp.tile(p.reshape(1, Cout).astype(jnp.float32), (1, W))

    g1r, b1r = tile_row(g1), tile_row(b1)
    g2r, b2r = tile_row(g2), tile_row(b2)
    gscr, bscr = tile_row(gsc), tile_row(bsc)

    vmem = pl.BlockSpec(memory_space=pltpu.MemorySpace.VMEM)
    smem = pl.BlockSpec(memory_space=pltpu.MemorySpace.SMEM)

    out_rows = pl.pallas_call(
        _make_kernel(H),
        out_shape=jax.ShapeDtypeStruct((M, W * Cout), jnp.float32),
        in_specs=[vmem] * 11 + [smem],                 # PReLU scalar lives in SMEM
        out_specs=vmem,
        compiler_params=pltpu.CompilerParams(vmem_limit_bytes=32 * 1024 * 1024),
    )(x_rows, w1big, w2big, wscbig, g1r, b1r, g2r, b2r, gscr, bscr,
      gmean, a.astype(jnp.float32))

    out = out_rows.reshape(N, H, W, Cout)
    return jnp.transpose(out, (0, 3, 1, 2))            # NHWC -> NCHW


def residual_block_reference(x_nchw, params):
    # Pure-JAX reference (same math) used only to sanity-check the kernel.
    (w1, g1, b1, w2, g2, b2, wsc, gsc, bsc, a) = params
    x = jnp.transpose(x_nchw, (0, 2, 3, 1)).astype(jnp.float32)

    def conv3x3(inp, w9):
        Ci, Co = w9.shape[1], w9.shape[2]
        wk = w9.reshape(3, 3, Ci, Co)
        return jax.lax.conv_general_dilated(
            inp, wk, window_strides=(1, 1), padding=((1, 1), (1, 1)),
            dimension_numbers=("NHWC", "HWIO", "NHWC"),
            precision=jax.lax.Precision.HIGHEST)

    def bn(y, g, b):
        m = jnp.mean(y, axis=(0, 1, 2), keepdims=True)
        v = jnp.var(y, axis=(0, 1, 2), keepdims=True)
        return (y - m) / jnp.sqrt(v + EPS) * g.reshape(1, 1, 1, -1) + b.reshape(1, 1, 1, -1)

    y = bn(conv3x3(x, w1), g1, b1)
    y = jnp.where(y > 0, y, a[0] * y)
    y = bn(conv3x3(y, w2), g2, b2)
    sc = bn(jnp.einsum("nhwc,co->nhwo", x, wsc,
                       precision=jax.lax.Precision.HIGHEST), gsc, bsc)
    out = jnp.maximum(y + sc, 0.0)
    return jnp.transpose(out, (0, 3, 1, 2))


if __name__ == "__main__":
    key = jax.random.PRNGKey(0)
    ks = jax.random.split(key, 10)
    N, Cin, Cout, H, W = 2, 4, 8, 16, 16

    x = jax.random.normal(ks[0], (N, Cin, H, W), jnp.float32)   # NCHW like PyTorch

    # Deterministic synthetic parameters (shapes follow the nn.Module __init__).
    # conv weights stored as (kh*kw, Cin, Cout) == PyTorch (Cout,Cin,3,3) transposed.
    w1 = 0.3 * jax.random.normal(ks[1], (9, Cin, Cout), jnp.float32)
    g1 = 1.0 + 0.1 * jax.random.normal(ks[2], (1, Cout), jnp.float32)
    b1 = 0.1 * jax.random.normal(ks[3], (1, Cout), jnp.float32)
    w2 = 0.2 * jax.random.normal(ks[4], (9, Cout, Cout), jnp.float32)
    g2 = 1.0 + 0.1 * jax.random.normal(ks[5], (1, Cout), jnp.float32)
    b2 = 0.1 * jax.random.normal(ks[6], (1, Cout), jnp.float32)
    wsc = 0.3 * jax.random.normal(ks[7], (Cin, Cout), jnp.float32)
    gsc = 1.0 + 0.1 * jax.random.normal(ks[8], (1, Cout), jnp.float32)
    bsc = 0.1 * jax.random.normal(ks[9], (1, Cout), jnp.float32)
    a = jnp.array([0.25], jnp.float32)   # nn.PReLU default init (single param)

    params = (w1, g1, b1, w2, g2, b2, wsc, gsc, bsc, a)

    out = jax.block_until_ready(residual_block(x, params))
    ref = jax.block_until_ready(residual_block_reference(x, params))

    assert out.shape == (N, Cout, H, W), out.shape
    rel_err = float(jnp.max(jnp.abs(out - ref)) / (jnp.max(jnp.abs(ref)) + 1e-6))
    assert rel_err < 3e-2, f"rel_err={rel_err}"
    print("KERNEL_OK")
</pallas_src>

<mosaic_0001>
module attributes {stable_mosaic.version = 11 : i64} {
  func.func @residual_block_kernel(%arg0: memref<32x64xf32, #tpu.memory_space<vmem>>, %arg1: memref<3x64x128xbf16, #tpu.memory_space<vmem>>, %arg2: memref<3x128x128xbf16, #tpu.memory_space<vmem>>, %arg3: memref<64x128xbf16, #tpu.memory_space<vmem>>, %arg4: memref<1x128xf32, #tpu.memory_space<vmem>>, %arg5: memref<1x128xf32, #tpu.memory_space<vmem>>, %arg6: memref<1x128xf32, #tpu.memory_space<vmem>>, %arg7: memref<1x128xf32, #tpu.memory_space<vmem>>, %arg8: memref<1x128xf32, #tpu.memory_space<vmem>>, %arg9: memref<1x128xf32, #tpu.memory_space<vmem>>, %arg10: memref<128x128xf32, #tpu.memory_space<vmem>>, %arg11: memref<1xf32, #tpu.memory_space<smem>>, %arg12: memref<32x128xf32, #tpu.memory_space<vmem>>) attributes {dimension_semantics = [], scalar_prefetch = 0 : i64, scratch_operands = 0 : i64, tpu.core_type = #tpu.core_type<tc>} {
    %c0 = arith.constant 0 : index
    %c0_0 = arith.constant 0 : index
    %0 = vector.load %arg0[%c0, %c0_0] : memref<32x64xf32, #tpu.memory_space<vmem>>, vector<32x64xf32>
    %c0_1 = arith.constant 0 : index
    %c0_2 = arith.constant 0 : index
    %1 = vector.load %arg10[%c0_1, %c0_2] : memref<128x128xf32, #tpu.memory_space<vmem>>, vector<128x128xf32>
    %2 = tpu.iota {dimensions = array<i32: 0>} : vector<32x1xi32>
    %c16_i32 = arith.constant 16 : i32
    %c0_i32 = arith.constant 0 : i32
    %3 = arith.cmpi eq, %c16_i32, %c0_i32 : i32
    %c1_i32 = arith.constant 1 : i32
    %4 = arith.select %3, %c1_i32, %c16_i32 : i32
    %5 = vector.broadcast %4 : i32 to vector<32x1xi32>
    %6 = arith.remsi %2, %5 : vector<32x1xi32>
    %c0_i32_3 = arith.constant 0 : i32
    %7 = vector.broadcast %c0_i32_3 : i32 to vector<32x1xi32>
    %8 = arith.cmpi ne, %6, %7 : vector<32x1xi32>
    %c0_i32_4 = arith.constant 0 : i32
    %9 = vector.broadcast %c0_i32_4 : i32 to vector<32x1xi32>
    %10 = arith.cmpi slt, %6, %9 : vector<32x1xi32>
    %c0_i32_5 = arith.constant 0 : i32
    %11 = arith.cmpi slt, %4, %c0_i32_5 : i32
    %12 = vector.broadcast %11 : i1 to vector<32x1xi1>
    %13 = vector.broadcast %12 : vector<32x1xi1> to vector<32x1xi1>
    %14 = arith.xori %10, %13 : vector<32x1xi1>
    %15 = arith.andi %14, %8 : vector<32x1xi1>
    %16 = vector.broadcast %4 : i32 to vector<32x1xi32>
    %17 = arith.addi %6, %16 : vector<32x1xi32>
    %18 = arith.select %15, %17, %6 : vector<32x1xi1>, vector<32x1xi32>
    %c0_i32_6 = arith.constant 0 : i32
    %19 = vector.broadcast %c0_i32_6 : i32 to vector<32x1xi32>
    %20 = arith.cmpi ne, %18, %19 : vector<32x1xi32>
    %c15_i32 = arith.constant 15 : i32
    %21 = vector.broadcast %c15_i32 : i32 to vector<32x1xi32>
    %22 = arith.cmpi ne, %18, %21 : vector<32x1xi32>
    %c1_i32_7 = arith.constant 1 : i32
    %23 = tpu.dynamic_rotate %0 by %c1_i32_7 dim 0 : vector<32x64xf32>, i32 -> vector<32x64xf32>
    %cst = arith.constant 0.000000e+00 : f32
    %24 = vector.shape_cast %20 : vector<32x1xi1> to vector<32x1xi1>
    %25 = vector.broadcast %24 : vector<32x1xi1> to vector<32x64xi1>
    %26 = vector.broadcast %cst : f32 to vector<32x64xf32>
    %27 = arith.select %25, %23, %26 : vector<32x64xi1>, vector<32x64xf32>
    %c31_i32 = arith.constant 31 : i32
    %28 = tpu.dynamic_rotate %0 by %c31_i32 dim 0 : vector<32x64xf32>, i32 -> vector<32x64xf32>
    %cst_8 = arith.constant 0.000000e+00 : f32
    %29 = vector.shape_cast %22 : vector<32x1xi1> to vector<32x1xi1>
    %30 = vector.broadcast %29 : vector<32x1xi1> to vector<32x64xi1>
    %31 = vector.broadcast %cst_8 : f32 to vector<32x64xf32>
    %32 = arith.select %30, %28, %31 : vector<32x64xi1>, vector<32x64xf32>
    %33 = arith.truncf %27 : vector<32x64xf32> to vector<32x64xbf16>
    %c0_9 = arith.constant 0 : index
    %c0_10 = arith.constant 0 : index
    %c0_11 = arith.constant 0 : index
    %34 = vector.load %arg1[%c0_9, %c0_10, %c0_11] : memref<3x64x128xbf16, #tpu.memory_space<vmem>>, vector<1x64x128xbf16>
    %35 = vector.shape_cast %34 : vector<1x64x128xbf16> to vector<64x128xbf16>
    %cst_12 = arith.constant dense<0.000000e+00> : vector<32x128xf32>
    %36 = tpu.matmul %33, %35, %cst_12 {dimension_numbers = #tpu.dot_dimension_numbers<[1], [0], [0], [1], [0, 0, 1, 1], [], []>} : vector<32x64xbf16>, vector<64x128xbf16>, vector<32x128xf32> -> vector<32x128xf32>
    %37 = arith.truncf %0 : vector<32x64xf32> to vector<32x64xbf16>
    %c1 = arith.constant 1 : index
    %c0_13 = arith.constant 0 : index
    %c0_14 = arith.constant 0 : index
    %38 = vector.load %arg1[%c1, %c0_13, %c0_14] : memref<3x64x128xbf16, #tpu.memory_space<vmem>>, vector<1x64x128xbf16>
    %39 = vector.shape_cast %38 : vector<1x64x128xbf16> to vector<64x128xbf16>
    %cst_15 = arith.constant dense<0.000000e+00> : vector<32x128xf32>
    %40 = tpu.matmul %37, %39, %cst_15 {dimension_numbers = #tpu.dot_dimension_numbers<[1], [0], [0], [1], [0, 0, 1, 1], [], []>} : vector<32x64xbf16>, vector<64x128xbf16>, vector<32x128xf32> -> vector<32x128xf32>
    %41 = arith.addf %36, %40 : vector<32x128xf32>
    %42 = arith.truncf %32 : vector<32x64xf32> to vector<32x64xbf16>
    %c2 = arith.constant 2 : index
    %c0_16 = arith.constant 0 : index
    %c0_17 = arith.constant 0 : index
    %43 = vector.load %arg1[%c2, %c0_16, %c0_17] : memref<3x64x128xbf16, #tpu.memory_space<vmem>>, vector<1x64x128xbf16>
    %44 = vector.shape_cast %43 : vector<1x64x128xbf16> to vector<64x128xbf16>
    %cst_18 = arith.constant dense<0.000000e+00> : vector<32x128xf32>
    %45 = tpu.matmul %42, %44, %cst_18 {dimension_numbers = #tpu.dot_dimension_numbers<[1], [0], [0], [1], [0, 0, 1, 1], [], []>} : vector<32x64xbf16>, vector<64x128xbf16>, vector<32x128xf32> -> vector<32x128xf32>
    %46 = arith.addf %41, %45 : vector<32x128xf32>
    %c0_19 = arith.constant 0 : index
    %c0_20 = arith.constant 0 : index
    %47 = vector.load %arg4[%c0_19, %c0_20] : memref<1x128xf32, #tpu.memory_space<vmem>>, vector<1x128xf32>
    %c0_21 = arith.constant 0 : index
    %c0_22 = arith.constant 0 : index
    %48 = vector.load %arg5[%c0_21, %c0_22] : memref<1x128xf32, #tpu.memory_space<vmem>>, vector<1x128xf32>
    %cst_23 = arith.constant dense<0.000000e+00> : vector<128xf32>
    %49 = vector.multi_reduction <add>, %46, %cst_23 [0] : vector<32x128xf32> to vector<128xf32>
    %50 = vector.shape_cast %49 : vector<128xf32> to vector<1x128xf32>
    %51 = arith.mulf %46, %46 : vector<32x128xf32>
    %cst_24 = arith.constant dense<0.000000e+00> : vector<128xf32>
    %52 = vector.multi_reduction <add>, %51, %cst_24 [0] : vector<32x128xf32> to vector<128xf32>
    %53 = vector.shape_cast %52 : vector<128xf32> to vector<1x128xf32>
    %54 = tpu.concatenate %50, %53 in 0 : vector<1x128xf32>, vector<1x128xf32> -> vector<2x128xf32>
    %cst_25 = arith.constant dense<0.000000e+00> : vector<2x128xf32>
    %55 = tpu.matmul %54, %1, %cst_25 {dimension_numbers = #tpu.dot_dimension_numbers<[1], [0], [0], [1], [0, 0, 1, 1], [], []>} : vector<2x128xf32>, vector<128x128xf32>, vector<2x128xf32> -> vector<2x128xf32>
    %56 = vector.extract_strided_slice %55 {offsets = [0, 0], sizes = [1, 128], strides = [1, 1]} : vector<2x128xf32> to vector<1x128xf32>
    %57 = vector.extract_strided_slice %55 {offsets = [1, 0], sizes = [1, 128], strides = [1, 1]} : vector<2x128xf32> to vector<1x128xf32>
    %58 = arith.mulf %56, %56 : vector<1x128xf32>
    %59 = arith.subf %57, %58 : vector<1x128xf32>
    %cst_26 = arith.constant 9.99999974E-6 : f32
    %60 = vector.broadcast %cst_26 : f32 to vector<1x128xf32>
    %61 = arith.addf %59, %60 : vector<1x128xf32>
    %62 = math.rsqrt %61 : vector<1x128xf32>
    %63 = arith.mulf %47, %62 : vector<1x128xf32>
    %64 = vector.broadcast %63 : vector<1x128xf32> to vector<32x128xf32>
    %65 = arith.mulf %46, %64 : vector<32x128xf32>
    %66 = arith.mulf %56, %63 : vector<1x128xf32>
    %67 = arith.subf %48, %66 : vector<1x128xf32>
    %68 = vector.broadcast %67 : vector<1x128xf32> to vector<32x128xf32>
    %69 = arith.addf %65, %68 : vector<32x128xf32>
    %c0_27 = arith.constant 0 : index
    %70 = memref.load %arg11[%c0_27] : memref<1xf32, #tpu.memory_space<smem>>
    %cst_28 = arith.constant 0.000000e+00 : f32
    %71 = vector.broadcast %cst_28 : f32 to vector<32x128xf32>
    %72 = arith.cmpf ogt, %69, %71 : vector<32x128xf32>
    %73 = vector.broadcast %70 : f32 to vector<32x128xf32>
    %74 = arith.mulf %73, %69 : vector<32x128xf32>
    %75 = arith.select %72, %69, %74 : vector<32x128xi1>, vector<32x128xf32>
    %c1_i32_29 = arith.constant 1 : i32
    %76 = tpu.dynamic_rotate %75 by %c1_i32_29 dim 0 : vector<32x128xf32>, i32 -> vector<32x128xf32>
    %cst_30 = arith.constant 0.000000e+00 : f32
    %77 = vector.shape_cast %20 : vector<32x1xi1> to vector<32x1xi1>
    %78 = vector.broadcast %77 : vector<32x1xi1> to vector<32x128xi1>
    %79 = vector.broadcast %cst_30 : f32 to vector<32x128xf32>
    %80 = arith.select %78, %76, %79 : vector<32x128xi1>, vector<32x128xf32>
    %c31_i32_31 = arith.constant 31 : i32
    %81 = tpu.dynamic_rotate %75 by %c31_i32_31 dim 0 : vector<32x128xf32>, i32 -> vector<32x128xf32>
    %cst_32 = arith.constant 0.000000e+00 : f32
    %82 = vector.shape_cast %22 : vector<32x1xi1> to vector<32x1xi1>
    %83 = vector.broadcast %82 : vector<32x1xi1> to vector<32x128xi1>
    %84 = vector.broadcast %cst_32 : f32 to vector<32x128xf32>
    %85 = arith.select %83, %81, %84 : vector<32x128xi1>, vector<32x128xf32>
    %86 = arith.truncf %80 : vector<32x128xf32> to vector<32x128xbf16>
    %c0_33 = arith.constant 0 : index
    %c0_34 = arith.constant 0 : index
    %c0_35 = arith.constant 0 : index
    %87 = vector.load %arg2[%c0_33, %c0_34, %c0_35] : memref<3x128x128xbf16, #tpu.memory_space<vmem>>, vector<1x128x128xbf16>
    %88 = vector.shape_cast %87 : vector<1x128x128xbf16> to vector<128x128xbf16>
    %cst_36 = arith.constant dense<0.000000e+00> : vector<32x128xf32>
    %89 = tpu.matmul %86, %88, %cst_36 {dimension_numbers = #tpu.dot_dimension_numbers<[1], [0], [0], [1], [0, 0, 1, 1], [], []>} : vector<32x128xbf16>, vector<128x128xbf16>, vector<32x128xf32> -> vector<32x128xf32>
    %90 = arith.truncf %75 : vector<32x128xf32> to vector<32x128xbf16>
    %c1_37 = arith.constant 1 : index
    %c0_38 = arith.constant 0 : index
    %c0_39 = arith.constant 0 : index
    %91 = vector.load %arg2[%c1_37, %c0_38, %c0_39] : memref<3x128x128xbf16, #tpu.memory_space<vmem>>, vector<1x128x128xbf16>
    %92 = vector.shape_cast %91 : vector<1x128x128xbf16> to vector<128x128xbf16>
    %cst_40 = arith.constant dense<0.000000e+00> : vector<32x128xf32>
    %93 = tpu.matmul %90, %92, %cst_40 {dimension_numbers = #tpu.dot_dimension_numbers<[1], [0], [0], [1], [0, 0, 1, 1], [], []>} : vector<32x128xbf16>, vector<128x128xbf16>, vector<32x128xf32> -> vector<32x128xf32>
    %94 = arith.addf %89, %93 : vector<32x128xf32>
    %95 = arith.truncf %85 : vector<32x128xf32> to vector<32x128xbf16>
    %c2_41 = arith.constant 2 : index
    %c0_42 = arith.constant 0 : index
    %c0_43 = arith.constant 0 : index
    %96 = vector.load %arg2[%c2_41, %c0_42, %c0_43] : memref<3x128x128xbf16, #tpu.memory_space<vmem>>, vector<1x128x128xbf16>
    %97 = vector.shape_cast %96 : vector<1x128x128xbf16> to vector<128x128xbf16>
    %cst_44 = arith.constant dense<0.000000e+00> : vector<32x128xf32>
    %98 = tpu.matmul %95, %97, %cst_44 {dimension_numbers = #tpu.dot_dimension_numbers<[1], [0], [0], [1], [0, 0, 1, 1], [], []>} : vector<32x128xbf16>, vector<128x128xbf16>, vector<32x128xf32> -> vector<32x128xf32>
    %99 = arith.addf %94, %98 : vector<32x128xf32>
    %c0_45 = arith.constant 0 : index
    %c0_46 = arith.constant 0 : index
    %100 = vector.load %arg6[%c0_45, %c0_46] : memref<1x128xf32, #tpu.memory_space<vmem>>, vector<1x128xf32>
    %c0_47 = arith.constant 0 : index
    %c0_48 = arith.constant 0 : index
    %101 = vector.load %arg7[%c0_47, %c0_48] : memref<1x128xf32, #tpu.memory_space<vmem>>, vector<1x128xf32>
    %cst_49 = arith.constant dense<0.000000e+00> : vector<128xf32>
    %102 = vector.multi_reduction <add>, %99, %cst_49 [0] : vector<32x128xf32> to vector<128xf32>
    %103 = vector.shape_cast %102 : vector<128xf32> to vector<1x128xf32>
    %104 = arith.mulf %99, %99 : vector<32x128xf32>
    %cst_50 = arith.constant dense<0.000000e+00> : vector<128xf32>
    %105 = vector.multi_reduction <add>, %104, %cst_50 [0] : vector<32x128xf32> to vector<128xf32>
    %106 = vector.shape_cast %105 : vector<128xf32> to vector<1x128xf32>
    %107 = tpu.concatenate %103, %106 in 0 : vector<1x128xf32>, vector<1x128xf32> -> vector<2x128xf32>
    %cst_51 = arith.constant dense<0.000000e+00> : vector<2x128xf32>
    %108 = tpu.matmul %107, %1, %cst_51 {dimension_numbers = #tpu.dot_dimension_numbers<[1], [0], [0], [1], [0, 0, 1, 1], [], []>} : vector<2x128xf32>, vector<128x128xf32>, vector<2x128xf32> -> vector<2x128xf32>
    %109 = vector.extract_strided_slice %108 {offsets = [0, 0], sizes = [1, 128], strides = [1, 1]} : vector<2x128xf32> to vector<1x128xf32>
    %110 = vector.extract_strided_slice %108 {offsets = [1, 0], sizes = [1, 128], strides = [1, 1]} : vector<2x128xf32> to vector<1x128xf32>
    %111 = arith.mulf %109, %109 : vector<1x128xf32>
    %112 = arith.subf %110, %111 : vector<1x128xf32>
    %cst_52 = arith.constant 9.99999974E-6 : f32
    %113 = vector.broadcast %cst_52 : f32 to vector<1x128xf32>
    %114 = arith.addf %112, %113 : vector<1x128xf32>
    %115 = math.rsqrt %114 : vector<1x128xf32>
    %116 = arith.mulf %100, %115 : vector<1x128xf32>
    %117 = vector.broadcast %116 : vector<1x128xf32> to vector<32x128xf32>
    %118 = arith.mulf %99, %117 : vector<32x128xf32>
    %119 = arith.mulf %109, %116 : vector<1x128xf32>
    %120 = arith.subf %101, %119 : vector<1x128xf32>
    %121 = vector.broadcast %120 : vector<1x128xf32> to vector<32x128xf32>
    %122 = arith.addf %118, %121 : vector<32x128xf32>
    %123 = arith.truncf %0 : vector<32x64xf32> to vector<32x64xbf16>
    %c0_53 = arith.constant 0 : index
    %c0_54 = arith.constant 0 : index
    %124 = vector.load %arg3[%c0_53, %c0_54] : memref<64x128xbf16, #tpu.memory_space<vmem>>, vector<64x128xbf16>
    %cst_55 = arith.constant dense<0.000000e+00> : vector<32x128xf32>
    %125 = tpu.matmul %123, %124, %cst_55 {dimension_numbers = #tpu.dot_dimension_numbers<[1], [0], [0], [1], [0, 0, 1, 1], [], []>} : vector<32x64xbf16>, vector<64x128xbf16>, vector<32x128xf32> -> vector<32x128xf32>
    %c0_56 = arith.constant 0 : index
    %c0_57 = arith.constant 0 : index
    %126 = vector.load %arg8[%c0_56, %c0_57] : memref<1x128xf32, #tpu.memory_space<vmem>>, vector<1x128xf32>
    %c0_58 = arith.constant 0 : index
    %c0_59 = arith.constant 0 : index
    %127 = vector.load %arg9[%c0_58, %c0_59] : memref<1x128xf32, #tpu.memory_space<vmem>>, vector<1x128xf32>
    %cst_60 = arith.constant dense<0.000000e+00> : vector<128xf32>
    %128 = vector.multi_reduction <add>, %125, %cst_60 [0] : vector<32x128xf32> to vector<128xf32>
    %129 = vector.shape_cast %128 : vector<128xf32> to vector<1x128xf32>
    %130 = arith.mulf %125, %125 : vector<32x128xf32>
    %cst_61 = arith.constant dense<0.000000e+00> : vector<128xf32>
    %131 = vector.multi_reduction <add>, %130, %cst_61 [0] : vector<32x128xf32> to vector<128xf32>
    %132 = vector.shape_cast %131 : vector<128xf32> to vector<1x128xf32>
    %133 = tpu.concatenate %129, %132 in 0 : vector<1x128xf32>, vector<1x128xf32> -> vector<2x128xf32>
    %cst_62 = arith.constant dense<0.000000e+00> : vector<2x128xf32>
    %134 = tpu.matmul %133, %1, %cst_62 {dimension_numbers = #tpu.dot_dimension_numbers<[1], [0], [0], [1], [0, 0, 1, 1], [], []>} : vector<2x128xf32>, vector<128x128xf32>, vector<2x128xf32> -> vector<2x128xf32>
    %135 = vector.extract_strided_slice %134 {offsets = [0, 0], sizes = [1, 128], strides = [1, 1]} : vector<2x128xf32> to vector<1x128xf32>
    %136 = vector.extract_strided_slice %134 {offsets = [1, 0], sizes = [1, 128], strides = [1, 1]} : vector<2x128xf32> to vector<1x128xf32>
    %137 = arith.mulf %135, %135 : vector<1x128xf32>
    %138 = arith.subf %136, %137 : vector<1x128xf32>
    %cst_63 = arith.constant 9.99999974E-6 : f32
    %139 = vector.broadcast %cst_63 : f32 to vector<1x128xf32>
    %140 = arith.addf %138, %139 : vector<1x128xf32>
    %141 = math.rsqrt %140 : vector<1x128xf32>
    %142 = arith.mulf %126, %141 : vector<1x128xf32>
    %143 = vector.broadcast %142 : vector<1x128xf32> to vector<32x128xf32>
    %144 = arith.mulf %125, %143 : vector<32x128xf32>
    %145 = arith.mulf %135, %142 : vector<1x128xf32>
    %146 = arith.subf %127, %145 : vector<1x128xf32>
    %147 = vector.broadcast %146 : vector<1x128xf32> to vector<32x128xf32>
    %148 = arith.addf %144, %147 : vector<32x128xf32>
    %149 = arith.addf %122, %148 : vector<32x128xf32>
    %cst_64 = arith.constant 0.000000e+00 : f32
    %150 = vector.broadcast %cst_64 : f32 to vector<32x128xf32>
    %151 = arith.maximumf %149, %150 : vector<32x128xf32>
    %c0_65 = arith.constant 0 : index
    %c0_66 = arith.constant 0 : index
    %152 = vector.load %arg12[%c0_65, %c0_66] : memref<32x128xf32, #tpu.memory_space<vmem>>, vector<32x128xf32>
    tpu.vector_store %arg12[%c0_65, %c0_66], %151 {strides = array<i32>} : memref<32x128xf32, #tpu.memory_space<vmem>>, vector<32x128xf32>,
    return
  }
}

</mosaic_0001>

<llo_original>
// kernel: tpu_custom_call.1
$region0: #{tpu_custom_call.1}
  #allocation0 [shape = 'u32[]', space=smem, size = 0x4, offset = 0x4, fixed_abs, tag = 'smem constant byte address 0x4 - core index']
  #allocation1 [shape = 'u32[144,128]{1,0:T(1,128)}', space=vmem, size = 0x12000, scoped, tag = 'internal scratch']
  #allocation2 [shape = 'f32[1]{0:T(128)S(6)}', space=smem, size = 0x200, scoped, tag = 'scoped memory for tpu_custom_call.1']
  %s0 = inlined_call_operand.hbm [shape: f32[32,64], index: 0, kind: input, shape index: {}]
  %s1 = inlined_call_operand.hbm [shape: bf16[3,64,128], index: 1, kind: input, shape index: {}]
  %s2 = inlined_call_operand.hbm [shape: bf16[3,128,128], index: 2, kind: input, shape index: {}]
  %s3 = inlined_call_operand.hbm [shape: bf16[64,128], index: 3, kind: input, shape index: {}]
  %s4 = inlined_call_operand.vmem [shape: f32[1,128], index: 4, kind: input, shape index: {}]
  %s5 = inlined_call_operand.vmem [shape: f32[1,128], index: 5, kind: input, shape index: {}]
  %s6 = inlined_call_operand.vmem [shape: f32[1,128], index: 6, kind: input, shape index: {}]
  %s7 = inlined_call_operand.vmem [shape: f32[1,128], index: 7, kind: input, shape index: {}]
  %s8 = inlined_call_operand.vmem [shape: f32[1,128], index: 8, kind: input, shape index: {}]
  %s9 = inlined_call_operand.vmem [shape: f32[1,128], index: 9, kind: input, shape index: {}]
  %s10 = inlined_call_operand.hbm [shape: f32[128,128], index: 10, kind: input, shape index: {}]
  %s11 = inlined_call_operand.<no memory space> [shape: f32[1], index: 11, kind: input, shape index: {}]
  %s12 = inlined_call_operand.hbm [shape: f32[32,128], index: 12, kind: output, shape index: {}]
  %s13 = sld [smem:[#allocation0]]
  $region78: #{tpu_custom_call.1} parent=0
    _
  %s15 = ssub.s32 1, %s13
  %s16 = scalar_select 0, %s15, %s13
  %17 = sst [smem:[#allocation2]] %s11
  $region1: #{tpu_custom_call.1} parent=0
    #allocation3 [shape = 'u8[16384]{0}', space=vmem, size = 0x4000, scoped, tag = 'input window, operand 0, single buffered']
    #allocation4 [shape = 's32[1]{0}', space=sflag, size = 0x4, scoped, tag = 'scoped memory for tpu_custom_call.1']
    #allocation5 [shape = 's32[1]{0}', space=sflag, size = 0x4, scoped, tag = 'scoped memory for tpu_custom_call.1']
    #allocation6 [shape = 'u8[49152]{0}', space=vmem, size = 0xc000, scoped, tag = 'input window, operand 1, single buffered']
    #allocation7 [shape = 's32[1]{0}', space=sflag, size = 0x4, scoped, tag = 'scoped memory for tpu_custom_call.1']
    #allocation8 [shape = 'u8[98304]{0}', space=vmem, size = 0x18000, scoped, tag = 'input window, operand 2, single buffered']
    #allocation9 [shape = 'u8[16384]{0}', space=vmem, size = 0x4000, scoped, tag = 'input window, operand 3, single buffered']
    #allocation10 [shape = 's32[1]{0}', space=sflag, size = 0x4, scoped, tag = 'scoped memory for tpu_custom_call.1']
    #allocation11 [shape = 'u8[65536]{0}', space=vmem, size = 0x10000, scoped, tag = 'input window, operand 10, single buffered']
    #allocation12 [shape = 'u8[16384]{0}', space=vmem, size = 0x4000, scoped, tag = 'output window, operand 0, single buffered']
    %18 = vsyncpa [#allocation4], 0
    %19 = vsyncpa [#allocation7], 0
    %20 = vsyncpa [#allocation10], 0
    %21 = vsyncpa [#allocation5], 0
    // Predicated region
    $region2: #{tpu_custom_call.1} parent=1 // pred_check
      _
    $region3: #{tpu_custom_call.1} parent=1 // pred_check_branch
      %23 = sbr.rel (0) target = $region5
    $region4: #{tpu_custom_call.1} parent=1 // pred_region
      %s25 = ssub.s32 512, 512
      %26 = vsyncadd [#allocation4], %s25
      %s27 = sshll.u32 [#allocation3], 4
      %s28 = int_to_ptr.vmem [resolvable:$true] %s27
      %33 = dma.hbm_to_vmem [thread:$0]  %s0, 512, %s28, [#allocation4], 128, 128, 8
    $region5: #{tpu_custom_call.1} parent=1 // pred_fallthru
      _
    // Predicated region
    $region6: #{tpu_custom_call.1} parent=1 // pred_check
      _
    $region7: #{tpu_custom_call.1} parent=1 // pred_check_branch
      %35 = sbr.rel (0) target = $region9
    $region8: #{tpu_custom_call.1} parent=1 // pred_region
      %s37 = ssub.s32 1536, 1536
      %38 = vsyncadd [#allocation7], %s37
      %s39 = sshll.u32 [#allocation6], 4
      %s40 = int_to_ptr.vmem [resolvable:$true] %s39
      %45 = dma.hbm_to_vmem [thread:$0]  %s1, 1536, %s40, [#allocation7], 64, 64, 4
    $region9: #{tpu_custom_call.1} parent=1 // pred_fallthru
      _
    // Predicated region
    $region10: #{tpu_custom_call.1} parent=1 // pred_check
      _
    $region11: #{tpu_custom_call.1} parent=1 // pred_check_branch
      %47 = sbr.rel (0) target = $region13
    $region12: #{tpu_custom_call.1} parent=1 // pred_region
      %s49 = ssub.s32 3072, 3072
      %50 = vsyncadd [#allocation7], %s49
      %s51 = sshll.u32 [#allocation8], 4
      %s52 = int_to_ptr.vmem [resolvable:$true] %s51
      %57 = dma.hbm_to_vmem [thread:$0]  %s2, 3072, %s52, [#allocation7], 64, 64, 4
    $region13: #{tpu_custom_call.1} parent=1 // pred_fallthru
      _
    // Predicated region
    $region14: #{tpu_custom_call.1} parent=1 // pred_check
      _
    $region15: #{tpu_custom_call.1} parent=1 // pred_check_branch
      %59 = sbr.rel (0) target = $region17
    $region16: #{tpu_custom_call.1} parent=1 // pred_region
      %s61 = ssub.s32 512, 512
      %62 = vsyncadd [#allocation10], %s61
      %s63 = sshll.u32 [#allocation9], 4
      %s64 = int_to_ptr.vmem [resolvable:$true] %s63
      %69 = dma.hbm_to_vmem [thread:$0]  %s3, 512, %s64, [#allocation10], 64, 64, 4
    $region17: #{tpu_custom_call.1} parent=1 // pred_fallthru
      _
    // Predicated region
    $region18: #{tpu_custom_call.1} parent=1 // pred_check
      _
    $region19: #{tpu_custom_call.1} parent=1 // pred_check_branch
      %71 = sbr.rel (0) target = $region21
    $region20: #{tpu_custom_call.1} parent=1 // pred_region
      _
    $region21: #{tpu_custom_call.1} parent=1 // pred_fallthru
      _
    // Predicated region
    $region22: #{tpu_custom_call.1} parent=1 // pred_check
      _
    $region23: #{tpu_custom_call.1} parent=1 // pred_check_branch
      %73 = sbr.rel (0) target = $region25
    $region24: #{tpu_custom_call.1} parent=1 // pred_region
      _
    $region25: #{tpu_custom_call.1} parent=1 // pred_fallthru
      _
    // Predicated region
    $region26: #{tpu_custom_call.1} parent=1 // pred_check
      _
    $region27: #{tpu_custom_call.1} parent=1 // pred_check_branch
      %75 = sbr.rel (0) target = $region29
    $region28: #{tpu_custom_call.1} parent=1 // pred_region
      _
    $region29: #{tpu_custom_call.1} parent=1 // pred_fallthru
      _
    // Predicated region
    $region30: #{tpu_custom_call.1} parent=1 // pred_check
      _
    $region31: #{tpu_custom_call.1} parent=1 // pred_check_branch
      %77 = sbr.rel (0) target = $region33
    $region32: #{tpu_custom_call.1} parent=1 // pred_region
      _
    $region33: #{tpu_custom_call.1} parent=1 // pred_fallthru
      _
    // Predicated region
    $region34: #{tpu_custom_call.1} parent=1 // pred_check
      _
    $region35: #{tpu_custom_call.1} parent=1 // pred_check_branch
      %79 = sbr.rel (0) target = $region37
    $region36: #{tpu_custom_call.1} parent=1 // pred_region
      _
    $region37: #{tpu_custom_call.1} parent=1 // pred_fallthru
      _
    // Predicated region
    $region38: #{tpu_custom_call.1} parent=1 // pred_check
      _
    $region39: #{tpu_custom_call.1} parent=1 // pred_check_branch
      %81 = sbr.rel (0) target = $region41
    $region40: #{tpu_custom_call.1} parent=1 // pred_region
      _
    $region41: #{tpu_custom_call.1} parent=1 // pred_fallthru
      _
    // Predicated region
    $region42: #{tpu_custom_call.1} parent=1 // pred_check
      _
    $region43: #{tpu_custom_call.1} parent=1 // pred_check_branch
      %83 = sbr.rel (0) target = $region45
    $region44: #{tpu_custom_call.1} parent=1 // pred_region
      %s85 = ssub.s32 2048, 2048
      %86 = vsyncadd [#allocation10], %s85
      %s87 = sshll.u32 [#allocation11], 4
      %s88 = int_to_ptr.vmem [resolvable:$true] %s87
      %93 = dma.hbm_to_vmem [thread:$0]  %s10, 2048, %s88, [#allocation10], 128, 128, 8
    $region45: #{tpu_custom_call.1} parent=1 // pred_fallthru
      _
    // Predicated region
    $region46: #{tpu_custom_call.1} parent=1 // pred_check
      _
    $region47: #{tpu_custom_call.1} parent=1 // pred_check_branch
      %95 = sbr.rel (0) target = $region49
    $region48: #{tpu_custom_call.1} parent=1 // pred_region
      _
    $region49: #{tpu_custom_call.1} parent=1 // pred_fallthru
      _
    // Predicated region
    $region50: #{tpu_custom_call.1} parent=1 // pred_check
      _
    $region51: #{tpu_custom_call.1} parent=1 // pred_check_branch
      %97 = sbr.rel (0) target = $region53
    $region52: #{tpu_custom_call.1} parent=1 // pred_region
      %98 = dma.done [#allocation4], 512
    $region53: #{tpu_custom_call.1} parent=1 // pred_fallthru
      _
    // Predicated region
    $region54: #{tpu_custom_call.1} parent=1 // pred_check
      _
    $region55: #{tpu_custom_call.1} parent=1 // pred_check_branch
      %100 = sbr.rel (0) target = $region57
    $region56: #{tpu_custom_call.1} parent=1 // pred_region
      %101 = dma.done [#allocation7], 1536
    $region57: #{tpu_custom_call.1} parent=1 // pred_fallthru
      _
    // Predicated region
    $region58: #{tpu_custom_call.1} parent=1 // pred_check
      _
    $region59: #{tpu_custom_call.1} parent=1 // pred_check_branch
      %103 = sbr.rel (0) target = $region61
    $region60: #{tpu_custom_call.1} parent=1 // pred_region
      %104 = dma.done [#allocation7], 3072
    $region61: #{tpu_custom_call.1} parent=1 // pred_fallthru
      _
    // Predicated region
    $region62: #{tpu_custom_call.1} parent=1 // pred_check
      _
    $region63: #{tpu_custom_call.1} parent=1 // pred_check_branch
      %106 = sbr.rel (0) target = $region65
    $region64: #{tpu_custom_call.1} parent=1 // pred_region
      %107 = dma.done [#allocation10], 512
    $region65: #{tpu_custom_call.1} parent=1 // pred_fallthru
      _
    // Predicated region
    $region66: #{tpu_custom_call.1} parent=1 // pred_check
      _
    $region67: #{tpu_custom_call.1} parent=1 // pred_check_branch
      %109 = sbr.rel (0) target = $region69
    $region68: #{tpu_custom_call.1} parent=1 // pred_region
      %110 = dma.done [#allocation10], 2048
    $region69: #{tpu_custom_call.1} parent=1 // pred_fallthru
      _
    %v112 = vld [vmem:[#allocation3] sm:$0xff]
    %v113 = vld [vmem:[#allocation3 + $0x8] sm:$0xff]
    %v114 = vld [vmem:[#allocation3 + $0x10] sm:$0xff]
    %v115 = vld [vmem:[#allocation3 + $0x18] sm:$0xff]
    %v116 = vld [vmem:[#allocation11] sm:$0xff]
    %v117 = vld [vmem:[#allocation11 + $0x8] sm:$0xff]
    %v118 = vld [vmem:[#allocation11 + $0x10] sm:$0xff]
    %v119 = vld [vmem:[#allocation11 + $0x18] sm:$0xff]
    %v120 = vld [vmem:[#allocation11 + $0x20] sm:$0xff]
    %v121 = vld [vmem:[#allocation11 + $0x28] sm:$0xff]
    %v122 = vld [vmem:[#allocation11 + $0x30] sm:$0xff]
    %v123 = vld [vmem:[#allocation11 + $0x38] sm:$0xff]
    %v124 = vld [vmem:[#allocation11 + $0x40] sm:$0xff]
    %v125 = vld [vmem:[#allocation11 + $0x48] sm:$0xff]
    %v126 = vld [vmem:[#allocation11 + $0x50] sm:$0xff]
    %v127 = vld [vmem:[#allocation11 + $0x58] sm:$0xff]
    %v128 = vld [vmem:[#allocation11 + $0x60] sm:$0xff]
    %v129 = vld [vmem:[#allocation11 + $0x68] sm:$0xff]
    %v130 = vld [vmem:[#allocation11 + $0x70] sm:$0xff]
    %v131 = vld [vmem:[#allocation11 + $0x78] sm:$0xff]
    %v132 = vlaneseq
    %v133 = vshrl.u32 %v132, 7
    %v134 = vadd.s32 %v133, 8
    %v135 = vadd.s32 %v133, 16
    %v136 = vadd.s32 %v133, 24
    %vm137 = vcmp.lt.s32.totalorder %v133, 0
    %v138 = vsub.s32 0, %v133
    %v139 = vsel %vm137, %v138, %v133
    %v140 = vshrl.u32 %v139, 4
    %v141 = vand.u32 %v139, 15
    %v142 = vsub.s32 0, %v141
    %v143 = vsel %vm137, %v142, %v141
    %vm144 = vcmp.lt.s32.totalorder %v134, 0
    %v145 = vsub.s32 0, %v134
    %v146 = vsel %vm144, %v145, %v134
    %v147 = vshrl.u32 %v146, 4
    %v148 = vand.u32 %v146, 15
    %v149 = vsub.s32 0, %v148
    %v150 = vsel %vm144, %v149, %v148
    %vm151 = vcmp.lt.s32.totalorder %v135, 0
    %v152 = vsub.s32 0, %v135
    %v153 = vsel %vm151, %v152, %v135
    %v154 = vshrl.u32 %v153, 4
    %v155 = vand.u32 %v153, 15
    %v156 = vsub.s32 0, %v155
    %v157 = vsel %vm151, %v156, %v155
    %vm158 = vcmp.lt.s32.totalorder %v136, 0
    %v159 = vsub.s32 0, %v136
    %v160 = vsel %vm158, %v159, %v136
    %v161 = vshrl.u32 %v160, 4
    %v162 = vand.u32 %v160, 15
    %v163 = vsub.s32 0, %v162
    %v164 = vsel %vm158, %v163, %v162
    %vm165 = vcmp.ne.s32.totalorder %v143, 0
    %vm166 = vcmp.ne.s32.totalorder %v150, 0
    %vm167 = vcmp.ne.s32.totalorder %v157, 0
    %vm168 = vcmp.ne.s32.totalorder %v164, 0
    %vm169 = vcmp.lt.s32.totalorder %v143, 0
    %vm170 = vcmp.lt.s32.totalorder %v150, 0
    %vm171 = vcmp.lt.s32.totalorder %v157, 0
    %vm172 = vcmp.lt.s32.totalorder %v164, 0
    %vm173 = vmand %vm169, %vm165
    %vm174 = vmand %vm170, %vm166
    %vm175 = vmand %vm171, %vm167
    %vm176 = vmand %vm172, %vm168
    %v177 = vadd.s32 %v143, 16
    %v178 = vadd.s32 %v150, 16
    %v179 = vadd.s32 %v157, 16
    %v180 = vadd.s32 %v164, 16
    %v181 = vsel %vm173, %v177, %v143
    %v182 = vsel %vm174, %v178, %v150
    %v183 = vsel %vm175, %v179, %v157
    %v184 = vsel %vm176, %v180, %v164
    %vm185 = vcmp.ne.s32.totalorder %v181, 0
    %vm186 = vcmp.ne.s32.totalorder %v182, 0
    %vm187 = vcmp.ne.s32.totalorder %v183, 0
    %vm188 = vcmp.ne.s32.totalorder %v184, 0
    %vm189 = vcmp.ne.s32.totalorder %v181, 15
    %vm190 = vcmp.ne.s32.totalorder %v182, 15
    %vm191 = vcmp.ne.s32.totalorder %v183, 15
    %vm192 = vcmp.ne.s32.totalorder %v184, 15
    %v193 = vrot.slane %v112, 7
    %v194 = vrot.slane %v113, 7
    %v195 = vrot.slane %v114, 7
    %v196 = vrot.slane %v115, 7
    %vm197 = vcmp.lt.s32.totalorder %v133, 1
    %v198 = vsel %vm197, %v195, %v196
    %v199 = vsel %vm197, %v194, %v195
    %v200 = vsel %vm197, %v193, %v194
    %v201 = vsel %vm197, %v196, %v193
    %v202 = vsel %vm185, 1, 0
    %v203 = vsel %vm186, 1, 0
    %v204 = vsel %vm187, 1, 0
    %v205 = vsel %vm188, 1, 0
    %vm206 = vcmp.eq.s32.totalorder %v202, 1
    %vm207 = vcmp.eq.s32.totalorder %v203, 1
    %vm208 = vcmp.eq.s32.totalorder %v204, 1
    %vm209 = vcmp.eq.s32.totalorder %v205, 1
    %v210 = vsel %vm206, %v201, 0.0
    %v211 = vsel %vm207, %v200, 0.0
    %v212 = vsel %vm208, %v199, 0.0
    %v213 = vsel %vm209, %v198, 0.0
    %v214 = vrot.slane %v112, 1
    %v215 = vrot.slane %v113, 1
    %v216 = vrot.slane %v114, 1
    %v217 = vrot.slane %v115, 1
    %vm218 = vcmp.lt.s32.totalorder %v133, 7
    %v219 = vsel %vm218, %v216, %v217
    %v220 = vsel %vm218, %v215, %v216
    %v221 = vsel %vm218, %v214, %v215
    %v222 = vsel %vm218, %v217, %v214
    %v223 = vsel %vm189, 1, 0
    %v224 = vsel %vm190, 1, 0
    %v225 = vsel %vm191, 1, 0
    %v226 = vsel %vm192, 1, 0
    %vm227 = vcmp.eq.s32.totalorder %v223, 1
    %vm228 = vcmp.eq.s32.totalorder %v224, 1
    %vm229 = vcmp.eq.s32.totalorder %v225, 1
    %vm230 = vcmp.eq.s32.totalorder %v226, 1
    %v231 = vsel %vm227, %v221, 0.0
    %v232 = vsel %vm228, %v220, 0.0
    %v233 = vsel %vm229, %v219, 0.0
    %v234 = vsel %vm230, %v222, 0.0
    %v235 = vpack.c.bf16 %v211, %v210
    %v236 = vpack.c.bf16 %v213, %v212
    %v237 = vld [vmem:[#allocation6] sm:$0xf]
    %v238 = vld [vmem:[#allocation6 + $0x4] sm:$0xf]
    %v239 = vld [vmem:[#allocation6 + $0x8] sm:$0xf]
    %v240 = vld [vmem:[#allocation6 + $0xc] sm:$0xf]
    %v241 = vld [vmem:[#allocation6 + $0x10] sm:$0xf]
    %v242 = vld [vmem:[#allocation6 + $0x14] sm:$0xf]
    %v243 = vld [vmem:[#allocation6 + $0x18] sm:$0xf]
    %v244 = vld [vmem:[#allocation6 + $0x1c] sm:$0xf]
    %v245 = vpack.c.bf16 %v113, %v112
    %v246 = vpack.c.bf16 %v115, %v114
    %s247 = scalar_lea.vmem [#allocation6], 32
    %v248 = vld [vmem:[%s247] sm:$0xf]
    %v249 = vld [vmem:[%s247 + $0x4] sm:$0xf]
    %v250 = vld [vmem:[%s247 + $0x8] sm:$0xf]
    %v251 = vld [vmem:[%s247 + $0xc] sm:$0xf]
    %v252 = vld [vmem:[%s247 + $0x10] sm:$0xf]
    %v253 = vld [vmem:[%s247 + $0x14] sm:$0xf]
    %v254 = vld [vmem:[%s247 + $0x18] sm:$0xf]
    %v255 = vld [vmem:[%s247 + $0x1c] sm:$0xf]
    %v264 = vunpack.c.l.b16 %v248
    %v265 = vunpack.c.l.b16 %v249
    %v266 = vunpack.c.l.b16 %v250
    %v267 = vunpack.c.l.b16 %v251
    %v268 = vunpack.c.l.b16 %v252
    %v269 = vunpack.c.l.b16 %v253
    %v270 = vunpack.c.l.b16 %v254
    %v271 = vunpack.c.l.b16 %v255
    %v272 = vpack.c.b16 %v265, %v264
    %v273 = vpack.c.b16 %v267, %v266
    %v274 = vpack.c.b16 %v269, %v268
    %v275 = vpack.c.b16 %v271, %v270
    %vm280 = vcmask 523264
    %v282 = vsel %vm280, %v245, 0
    %v285 = vsel %vm280, %v246, 0
    %287 = vmatprep.subr.bf16.mxu0 0
    %288 = vmatpush1.bf16.msra.mxu0 0
    %289 = vmatprep.subr.bf16.mxu0 0
    %290 = vmatpush1.bf16.msra.mxu0 0
    %291 = vmatprep.subr.bf16.mxu0 0
    %292 = vmatpush1.bf16.msra.mxu0 0
    %293 = vmatprep.subr.bf16.mxu0 0
    %294 = vmatpush1.bf16.msra.mxu0 0
    %295 = vmatprep.subr.bf16.mxu0 0
    %296 = vmatpush1.bf16.msra.mxu0 %v275
    %297 = vmatprep.subr.bf16.mxu0 0
    %298 = vmatpush1.bf16.msra.mxu0 %v274
    %299 = vmatprep.subr.bf16.mxu0 0
    %300 = vmatpush1.bf16.msra.mxu0 %v273
    %301 = vmatprep.subr.bf16.mxu0 0
    %302 = vmatpush1.bf16.msra.mxu0 %v272
    %303 = vmatprep.subr.bf16.mxu0 0
    %304 = vmatpush2.bf16.msra.mxu0 0
    %305 = vmatprep.subr.bf16.mxu0 0
    %306 = vmatpush2.bf16.msra.mxu0 0
    %307 = vmatprep.subr.bf16.mxu0 0
    %308 = vmatpush2.bf16.msra.mxu0 0
    %309 = vmatprep.subr.bf16.mxu0 0
    %310 = vmatpush2.bf16.msra.mxu0 0
    %311 = vmatprep.subr.bf16.mxu0 0
    %312 = vmatpush2.bf16.msra.mxu0 0
    %313 = vmatprep.subr.bf16.mxu0 0
    %314 = vmatpush2.bf16.msra.mxu0 0
    %315 = vmatprep.subr.bf16.mxu0 0
    %316 = vmatpush2.bf16.msra.mxu0 0
    %317 = vmatprep.subr.bf16.mxu0 0
    %318 = vmatpush2.bf16.msra.mxu0 0
    %319 = vmatprep.mubr.bf16.mxu0 0
    %320 = vmatmul.mubr.bf16.gmra.mxu0 %v282
    %v321 = vpop.f32.mrf.mxu0
    %v322 = vadd.f32 0.0, %v321
    %v323 = vpop.f32.mrf.mxu0
    %v324 = vpop.f32.mrf.mxu0
    %v325 = vadd.f32 0.0, %v324
    %v326 = vpop.f32.mrf.mxu0
    %327 = vmatprep.mubr.bf16.mxu0 0
    %328 = vmatmul.mubr.bf16.gmra.mxu0 %v285
    %v329 = vpop.f32.mrf.mxu0
    %v330 = vadd.f32 0.0, %v329
    %v331 = vpop.f32.mrf.mxu0
    %v332 = vpop.f32.mrf.mxu0
    %v333 = vadd.f32 0.0, %v332
    %v334 = vpop.f32.mrf.mxu0
    %335 = vdwg.mxu0
    %v344 = vunpack.c.l.b16 %v237
    %v345 = vunpack.c.l.b16 %v238
    %v346 = vunpack.c.l.b16 %v239
    %v347 = vunpack.c.l.b16 %v240
    %v348 = vunpack.c.l.b16 %v241
    %v349 = vunpack.c.l.b16 %v242
    %v350 = vunpack.c.l.b16 %v243
    %v351 = vunpack.c.l.b16 %v244
    %v352 = vpack.c.b16 %v345, %v344
    %v353 = vpack.c.b16 %v347, %v346
    %v354 = vpack.c.b16 %v349, %v348
    %v355 = vpack.c.b16 %v351, %v350
    %v361 = vsel %vm280, %v235, 0
    %v364 = vsel %vm280, %v236, 0
    %366 = vmatprep.subr.bf16.mxu0 0
    %367 = vmatpush1.bf16.msra.mxu0 0
    %368 = vmatprep.subr.bf16.mxu0 0
    %369 = vmatpush1.bf16.msra.mxu0 0
    %370 = vmatprep.subr.bf16.mxu0 0
    %371 = vmatpush1.bf16.msra.mxu0 0
    %372 = vmatprep.subr.bf16.mxu0 0
    %373 = vmatpush1.bf16.msra.mxu0 0
    %374 = vmatprep.subr.bf16.mxu0 0
    %375 = vmatpush1.bf16.msra.mxu0 %v355
    %376 = vmatprep.subr.bf16.mxu0 0
    %377 = vmatpush1.bf16.msra.mxu0 %v354
    %378 = vmatprep.subr.bf16.mxu0 0
    %379 = vmatpush1.bf16.msra.mxu0 %v353
    %380 = vmatprep.subr.bf16.mxu0 0
    %381 = vmatpush1.bf16.msra.mxu0 %v352
    %382 = vmatprep.subr.bf16.mxu0 0
    %383 = vmatpush2.bf16.msra.mxu0 0
    %384 = vmatprep.subr.bf16.mxu0 0
    %385 = vmatpush2.bf16.msra.mxu0 0
    %386 = vmatprep.subr.bf16.mxu0 0
    %387 = vmatpush2.bf16.msra.mxu0 0
    %388 = vmatprep.subr.bf16.mxu0 0
    %389 = vmatpush2.bf16.msra.mxu0 0
    %390 = vmatprep.subr.bf16.mxu0 0
    %391 = vmatpush2.bf16.msra.mxu0 0
    %392 = vmatprep.subr.bf16.mxu0 0
    %393 = vmatpush2.bf16.msra.mxu0 0
    %394 = vmatprep.subr.bf16.mxu0 0
    %395 = vmatpush2.bf16.msra.mxu0 0
    %396 = vmatprep.subr.bf16.mxu0 0
    %397 = vmatpush2.bf16.msra.mxu0 0
    %398 = vmatprep.mubr.bf16.mxu0 0
    %399 = vmatmul.mubr.bf16.gmra.mxu0 %v361
    %v400 = vpop.f32.mrf.mxu0
    %v401 = vadd.f32 %v322, %v400
    %v402 = vpop.f32.mrf.mxu0
    %v403 = vpop.f32.mrf.mxu0
    %v404 = vadd.f32 %v325, %v403
    %v405 = vpop.f32.mrf.mxu0
    %406 = vmatprep.mubr.bf16.mxu0 0
    %407 = vmatmul.mubr.bf16.gmra.mxu0 %v364
    %v408 = vpop.f32.mrf.mxu0
    %v409 = vadd.f32 %v330, %v408
    %v410 = vpop.f32.mrf.mxu0
    %v411 = vpop.f32.mrf.mxu0
    %v412 = vadd.f32 %v333, %v411
    %v413 = vpop.f32.mrf.mxu0
    %414 = vdwg.mxu0
    %v415 = vpack.c.bf16 %v232, %v231
    %v416 = vpack.c.bf16 %v234, %v233
    %s417 = scalar_lea.vmem [#allocation6], 64
    %v418 = vld [vmem:[%s417] sm:$0xf]
    %v419 = vld [vmem:[%s417 + $0x4] sm:$0xf]
    %v420 = vld [vmem:[%s417 + $0x8] sm:$0xf]
    %v421 = vld [vmem:[%s417 + $0xc] sm:$0xf]
    %v422 = vld [vmem:[%s417 + $0x10] sm:$0xf]
    %v423 = vld [vmem:[%s417 + $0x14] sm:$0xf]
    %v424 = vld [vmem:[%s417 + $0x18] sm:$0xf]
    %v425 = vld [vmem:[%s417 + $0x1c] sm:$0xf]
    %v434 = vunpack.c.l.b16 %v418
    %v435 = vunpack.c.l.b16 %v419
    %v436 = vunpack.c.l.b16 %v420
    %v437 = vunpack.c.l.b16 %v421
    %v438 = vunpack.c.l.b16 %v422
    %v439 = vunpack.c.l.b16 %v423
    %v440 = vunpack.c.l.b16 %v424
    %v441 = vunpack.c.l.b16 %v425
    %v442 = vpack.c.b16 %v435, %v434
    %v443 = vpack.c.b16 %v437, %v436
    %v444 = vpack.c.b16 %v439, %v438
    %v445 = vpack.c.b16 %v441, %v440
    %v451 = vsel %vm280, %v415, 0
    %v454 = vsel %vm280, %v416, 0
    %456 = vmatprep.subr.bf16.mxu0 0
    %457 = vmatpush1.bf16.msra.mxu0 0
    %458 = vmatprep.subr.bf16.mxu0 0
    %459 = vmatpush1.bf16.msra.mxu0 0
    %460 = vmatprep.subr.bf16.mxu0 0
    %461 = vmatpush1.bf16.msra.mxu0 0
    %462 = vmatprep.subr.bf16.mxu0 0
    %463 = vmatpush1.bf16.msra.mxu0 0
    %464 = vmatprep.subr.bf16.mxu0 0
    %465 = vmatpush1.bf16.msra.mxu0 %v445
    %466 = vmatprep.subr.bf16.mxu0 0
    %467 = vmatpush1.bf16.msra.mxu0 %v444
    %468 = vmatprep.subr.bf16.mxu0 0
    %469 = vmatpush1.bf16.msra.mxu0 %v443
    %470 = vmatprep.subr.bf16.mxu0 0
    %471 = vmatpush1.bf16.msra.mxu0 %v442
    %472 = vmatprep.subr.bf16.mxu0 0
    %473 = vmatpush2.bf16.msra.mxu0 0
    %474 = vmatprep.subr.bf16.mxu0 0
    %475 = vmatpush2.bf16.msra.mxu0 0
    %476 = vmatprep.subr.bf16.mxu0 0
    %477 = vmatpush2.bf16.msra.mxu0 0
    %478 = vmatprep.subr.bf16.mxu0 0
    %479 = vmatpush2.bf16.msra.mxu0 0
    %480 = vmatprep.subr.bf16.mxu0 0
    %481 = vmatpush2.bf16.msra.mxu0 0
    %482 = vmatprep.subr.bf16.mxu0 0
    %483 = vmatpush2.bf16.msra.mxu0 0
    %484 = vmatprep.subr.bf16.mxu0 0
    %485 = vmatpush2.bf16.msra.mxu0 0
    %486 = vmatprep.subr.bf16.mxu0 0
    %487 = vmatpush2.bf16.msra.mxu0 0
    %488 = vmatprep.mubr.bf16.mxu0 0
    %489 = vmatmul.mubr.bf16.gmra.mxu0 %v451
    %v490 = vpop.f32.mrf.mxu0
    %v491 = vadd.f32 0.0, %v490
    %v492 = vpop.f32.mrf.mxu0
    %v493 = vpop.f32.mrf.mxu0
    %v494 = vadd.f32 0.0, %v493
    %v495 = vpop.f32.mrf.mxu0
    %496 = vmatprep.mubr.bf16.mxu0 0
    %497 = vmatmul.mubr.bf16.gmra.mxu0 %v454
    %v498 = vpop.f32.mrf.mxu0
    %v499 = vadd.f32 0.0, %v498
    %v500 = vpop.f32.mrf.mxu0
    %v501 = vpop.f32.mrf.mxu0
    %v502 = vadd.f32 0.0, %v501
    %v503 = vpop.f32.mrf.mxu0
    %504 = vdwg.mxu0
    %v505 = vadd.f32 %v401, %v491
    %v506 = vadd.f32 %v404, %v494
    %v507 = vadd.f32 %v409, %v499
    %v508 = vadd.f32 %v412, %v502
    %v509 = vld [vmem:[%s4] sm:$0x1]
    %v510 = vld [vmem:[%s5] sm:$0x1]
    %v511 = vadd.f32 %v505, %v506
    %v512 = vadd.f32 %v511, %v507
    %v513 = vadd.f32 %v512, %v508
    %v514 = vrot.slane %v513, 4
    %v515 = vadd.f32 %v513, %v514
    %v516 = vrot.slane %v515, 2
    %v517 = vadd.f32 %v515, %v516
    %v518 = vrot.slane %v517, 1
    %v519 = vadd.f32 %v517, %v518
    %v520 = vmul.f32 %v505, %v505
    %v521 = vmul.f32 %v506, %v506
    %v522 = vmul.f32 %v507, %v507
    %v523 = vmul.f32 %v508, %v508
    %v524 = vadd.f32 %v520, %v521
    %v525 = vadd.f32 %v524, %v522
    %v526 = vadd.f32 %v525, %v523
    %v527 = vrot.slane %v526, 4
    %v528 = vadd.f32 %v526, %v527
    %v529 = vrot.slane %v528, 2
    %v530 = vadd.f32 %v528, %v529
    %v531 = vrot.slane %v530, 1
    %v532 = vadd.f32 %v530, %v531
    %vm533 = vcmask 1040384
    %v534 = vsel %vm533, %v519, %v532
    %535 = vmatprep.subr.mxu0 0.0
    %536 = vmatpush1.msra.mxu0 %v131
    %537 = vmatprep.subr.mxu0 0.0
    %538 = vmatpush1.msra.mxu0 %v130
    %539 = vmatprep.subr.mxu0 0.0
    %540 = vmatpush1.msra.mxu0 %v129
    %541 = vmatprep.subr.mxu0 0.0
    %542 = vmatpush1.msra.mxu0 %v128
    %543 = vmatprep.subr.mxu0 0.0
    %544 = vmatpush1.msra.mxu0 %v127
    %545 = vmatprep.subr.mxu0 0.0
    %546 = vmatpush1.msra.mxu0 %v126
    %547 = vmatprep.subr.mxu0 0.0
    %548 = vmatpush1.msra.mxu0 %v125
    %549 = vmatprep.subr.mxu0 0.0
    %550 = vmatpush1.msra.mxu0 %v124
    %551 = vmatprep.subr.mxu0 0.0
    %552 = vmatpush1.msra.mxu0 %v123
    %553 = vmatprep.subr.mxu0 0.0
    %554 = vmatpush1.msra.mxu0 %v122
    %555 = vmatprep.subr.mxu0 0.0
    %556 = vmatpush1.msra.mxu0 %v121
    %557 = vmatprep.subr.mxu0 0.0
    %558 = vmatpush1.msra.mxu0 %v120
    %559 = vmatprep.subr.mxu0 0.0
    %560 = vmatpush1.msra.mxu0 %v119
    %561 = vmatprep.subr.mxu0 0.0
    %562 = vmatpush1.msra.mxu0 %v118
    %563 = vmatprep.subr.mxu0 0.0
    %564 = vmatpush1.msra.mxu0 %v117
    %565 = vmatprep.subr.mxu0 0.0
    %566 = vmatpush1.msra.mxu0 %v116
    %567 = vmatprep.subr.mxu0 0.0
    %568 = vmatpush2.msra.mxu0 0.0
    %569 = vmatprep.subr.mxu0 0.0
    %570 = vmatpush2.msra.mxu0 0.0
    %571 = vmatprep.subr.mxu0 0.0
    %572 = vmatpush2.msra.mxu0 0.0
    %573 = vmatprep.subr.mxu0 0.0
    %574 = vmatpush2.msra.mxu0 0.0
    %575 = vmatprep.subr.mxu0 0.0
    %576 = vmatpush2.msra.mxu0 0.0
    %577 = vmatprep.subr.mxu0 0.0
    %578 = vmatpush2.msra.mxu0 0.0
    %579 = vmatprep.subr.mxu0 0.0
    %580 = vmatpush2.msra.mxu0 0.0
    %581 = vmatprep.subr.mxu0 0.0
    %582 = vmatpush2.msra.mxu0 0.0
    %583 = vmatprep.subr.mxu0 0.0
    %584 = vmatpush2.msra.mxu0 0.0
    %585 = vmatprep.subr.mxu0 0.0
    %586 = vmatpush2.msra.mxu0 0.0
    %587 = vmatprep.subr.mxu0 0.0
    %588 = vmatpush2.msra.mxu0 0.0
    %589 = vmatprep.subr.mxu0 0.0
    %590 = vmatpush2.msra.mxu0 0.0
    %591 = vmatprep.subr.mxu0 0.0
    %592 = vmatpush2.msra.mxu0 0.0
    %593 = vmatprep.subr.mxu0 0.0
    %594 = vmatpush2.msra.mxu0 0.0
    %595 = vmatprep.subr.mxu0 0.0
    %596 = vmatpush2.msra.mxu0 0.0
    %597 = vmatprep.subr.mxu0 0.0
    %598 = vmatpush2.msra.mxu0 0.0
    %599 = vmatprep.mubr.f32.mxu0 0.0
    %600 = vmatmul.mubr.f32.gmra.mxu0 %v534
    %v601 = vpop.f32.mrf.mxu0
    %v602 = vadd.f32 0.0, %v601
    %v603 = vpop.f32.mrf.mxu0
    %604 = vdwg.mxu0
    %v605 = vmul.f32 %v602, %v602
    %v607 = vrot.slane %v605, 7
    %v609 = vsub.f32 %v602, %v607
    %v610 = vadd.f32 %v609, 1e-05
    %v611 = vrsqrt.pop %v610
    %v614 = vunpack.c.l.s4 1966171168
    %v615 = vunpack.c.0.s8 %v614
    %v616 = vlaneseq
    %v617 = vshrl.u32 %v616, 7
    %v618 = vsub.s32 %v615, %v617
    %v619 = vrot.slane %v611, %v618
    %v620 = vcombine.high %v619, %v619
    %v622 = vunpack.c.l.s4 1966171168
    %v623 = vunpack.c.0.s8 %v622
    %v624 = vlaneseq
    %v625 = vshrl.u32 %v624, 7
    %v626 = vsub.s32 %v623, %v625
    %v627 = vrot.slane %v620, %v626
    %v629 = vmul.f32 %v509, %v627
    %v631 = vlaneseq
    %v632 = vshrl.u32 %v631, 7
    %v633 = vsub.s32 0, %v632
    %v634 = vrot.slane %v629, %v633
    %v636 = vmul.f32 %v505, %v634
    %v637 = vmul.f32 %v506, %v634
    %v638 = vmul.f32 %v507, %v634
    %v639 = vmul.f32 %v508, %v634
    %v640 = vmul.f32 %v602, %v629
    %v641 = vsub.f32 %v510, %v640
    %v643 = vlaneseq
    %v644 = vshrl.u32 %v643, 7
    %v645 = vsub.s32 0, %v644
    %v646 = vrot.slane %v641, %v645
    %v648 = vadd.f32 %v636, %v646
    %v649 = vadd.f32 %v637, %v646
    %v650 = vadd.f32 %v638, %v646
    %v651 = vadd.f32 %v639, %v646
    %s652 = sld [smem:[#allocation2]]
    %vm653 = vcmp.gt.f32.partialorder %v648, 0.0
    %vm654 = vcmp.gt.f32.partialorder %v649, 0.0
    %vm655 = vcmp.gt.f32.partialorder %v650, 0.0
    %vm656 = vcmp.gt.f32.partialorder %v651, 0.0
    %v657 = vstv %s652
    %v658 = vmul.f32 %v657, %v648
    %v659 = vmul.f32 %v657, %v649
    %v660 = vmul.f32 %v657, %v650
    %v661 = vmul.f32 %v657, %v651
    %v662 = vsel %vm653, %v648, %v658
    %v663 = vsel %vm654, %v649, %v659
    %v664 = vsel %vm655, %v650, %v660
    %v665 = vsel %vm656, %v651, %v661
    %v666 = vrot.slane %v662, 7
    %v667 = vrot.slane %v663, 7
    %v668 = vrot.slane %v664, 7
    %v669 = vrot.slane %v665, 7
    %v670 = vsel %vm197, %v668, %v669
    %v671 = vsel %vm197, %v667, %v668
    %v672 = vsel %vm197, %v666, %v667
    %v673 = vsel %vm197, %v669, %v666
    %v674 = vsel %vm206, %v673, 0.0
    %v675 = vsel %vm207, %v672, 0.0
    %v676 = vsel %vm208, %v671, 0.0
    %v677 = vsel %vm209, %v670, 0.0
    %v678 = vrot.slane %v662, 1
    %v679 = vrot.slane %v663, 1
    %v680 = vrot.slane %v664, 1
    %v681 = vrot.slane %v665, 1
    %v682 = vsel %vm218, %v680, %v681
    %v683 = vsel %vm218, %v679, %v680
    %v684 = vsel %vm218, %v678, %v679
    %v685 = vsel %vm218, %v681, %v678
    %v686 = vsel %vm227, %v684, 0.0
    %v687 = vsel %vm228, %v683, 0.0
    %v688 = vsel %vm229, %v682, 0.0
    %v689 = vsel %vm230, %v685, 0.0
    %v690 = vpack.c.bf16 %v675, %v674
    %v691 = vpack.c.bf16 %v677, %v676
    %v692 = vld [vmem:[#allocation8] sm:$0xf]
    %v693 = vld [vmem:[#allocation8 + $0x4] sm:$0xf]
    %v694 = vld [vmem:[#allocation8 + $0x8] sm:$0xf]
    %v695 = vld [vmem:[#allocation8 + $0xc] sm:$0xf]
    %v696 = vld [vmem:[#allocation8 + $0x10] sm:$0xf]
    %v697 = vld [vmem:[#allocation8 + $0x14] sm:$0xf]
    %v698 = vld [vmem:[#allocation8 + $0x18] sm:$0xf]
    %v699 = vld [vmem:[#allocation8 + $0x1c] sm:$0xf]
    %v700 = vld [vmem:[#allocation8 + $0x20] sm:$0xf]
    %v701 = vld [vmem:[#allocation8 + $0x24] sm:$0xf]
    %v702 = vld [vmem:[#allocation8 + $0x28] sm:$0xf]
    %v703 = vld [vmem:[#allocation8 + $0x2c] sm:$0xf]
    %v704 = vld [vmem:[#allocation8 + $0x30] sm:$0xf]
    %v705 = vld [vmem:[#allocation8 + $0x34] sm:$0xf]
    %v706 = vld [vmem:[#allocation8 + $0x38] sm:$0xf]
    %v707 = vld [vmem:[#allocation8 + $0x3c] sm:$0xf]
    %v708 = vpack.c.bf16 %v663, %v662
    %v709 = vpack.c.bf16 %v665, %v664
    %s710 = scalar_lea.vmem [#allocation8], 64
    %v711 = vld [vmem:[%s710] sm:$0xf]
    %v712 = vld [vmem:[%s710 + $0x4] sm:$0xf]
    %v713 = vld [vmem:[%s710 + $0x8] sm:$0xf]
    %v714 = vld [vmem:[%s710 + $0xc] sm:$0xf]
    %v715 = vld [vmem:[%s710 + $0x10] sm:$0xf]
    %v716 = vld [vmem:[%s710 + $0x14] sm:$0xf]
    %v717 = vld [vmem:[%s710 + $0x18] sm:$0xf]
    %v718 = vld [vmem:[%s710 + $0x1c] sm:$0xf]
    %v719 = vld [vmem:[%s710 + $0x20] sm:$0xf]
    %v720 = vld [vmem:[%s710 + $0x24] sm:$0xf]
    %v721 = vld [vmem:[%s710 + $0x28] sm:$0xf]
    %v722 = vld [vmem:[%s710 + $0x2c] sm:$0xf]
    %v723 = vld [vmem:[%s710 + $0x30] sm:$0xf]
    %v724 = vld [vmem:[%s710 + $0x34] sm:$0xf]
    %v725 = vld [vmem:[%s710 + $0x38] sm:$0xf]
    %v726 = vld [vmem:[%s710 + $0x3c] sm:$0xf]
    %v743 = vunpack.c.l.b16 %v711
    %v744 = vunpack.c.l.b16 %v712
    %v745 = vunpack.c.l.b16 %v713
    %v746 = vunpack.c.l.b16 %v714
    %v747 = vunpack.c.l.b16 %v715
    %v748 = vunpack.c.l.b16 %v716
    %v749 = vunpack.c.l.b16 %v717
    %v750 = vunpack.c.l.b16 %v718
    %v751 = vunpack.c.l.b16 %v719
    %v752 = vunpack.c.l.b16 %v720
    %v753 = vunpack.c.l.b16 %v721
    %v754 = vunpack.c.l.b16 %v722
    %v755 = vunpack.c.l.b16 %v723
    %v756 = vunpack.c.l.b16 %v724
    %v757 = vunpack.c.l.b16 %v725
    %v758 = vunpack.c.l.b16 %v726
    %v759 = vpack.c.b16 %v744, %v743
    %v760 = vpack.c.b16 %v746, %v745
    %v761 = vpack.c.b16 %v748, %v747
    %v762 = vpack.c.b16 %v750, %v749
    %v763 = vpack.c.b16 %v752, %v751
    %v764 = vpack.c.b16 %v754, %v753
    %v765 = vpack.c.b16 %v756, %v755
    %v766 = vpack.c.b16 %v758, %v757
    %775 = vmatprep.subr.bf16.mxu0 0
    %776 = vmatpush1.bf16.msra.mxu0 %v766
    %777 = vmatprep.subr.bf16.mxu0 0
    %778 = vmatpush1.bf16.msra.mxu0 %v765
    %779 = vmatprep.subr.bf16.mxu0 0
    %780 = vmatpush1.bf16.msra.mxu0 %v764
    %781 = vmatprep.subr.bf16.mxu0 0
    %782 = vmatpush1.bf16.msra.mxu0 %v763
    %783 = vmatprep.subr.bf16.mxu0 0
    %784 = vmatpush1.bf16.msra.mxu0 %v762
    %785 = vmatprep.subr.bf16.mxu0 0
    %786 = vmatpush1.bf16.msra.mxu0 %v761
    %787 = vmatprep.subr.bf16.mxu0 0
    %788 = vmatpush1.bf16.msra.mxu0 %v760
    %789 = vmatprep.subr.bf16.mxu0 0
    %790 = vmatpush1.bf16.msra.mxu0 %v759
    %791 = vmatprep.subr.bf16.mxu0 0
    %792 = vmatpush2.bf16.msra.mxu0 0
    %793 = vmatprep.subr.bf16.mxu0 0
    %794 = vmatpush2.bf16.msra.mxu0 0
    %795 = vmatprep.subr.bf16.mxu0 0
    %796 = vmatpush2.bf16.msra.mxu0 0
    %797 = vmatprep.subr.bf16.mxu0 0
    %798 = vmatpush2.bf16.msra.mxu0 0
    %799 = vmatprep.subr.bf16.mxu0 0
    %800 = vmatpush2.bf16.msra.mxu0 0
    %801 = vmatprep.subr.bf16.mxu0 0
    %802 = vmatpush2.bf16.msra.mxu0 0
    %803 = vmatprep.subr.bf16.mxu0 0
    %804 = vmatpush2.bf16.msra.mxu0 0
    %805 = vmatprep.subr.bf16.mxu0 0
    %806 = vmatpush2.bf16.msra.mxu0 0
    %807 = vmatprep.mubr.bf16.mxu0 0
    %808 = vmatmul.mubr.bf16.gmra.mxu0 %v708
    %v809 = vpop.f32.mrf.mxu0
    %v810 = vadd.f32 0.0, %v809
    %v811 = vpop.f32.mrf.mxu0
    %v812 = vpop.f32.mrf.mxu0
    %v813 = vadd.f32 0.0, %v812
    %v814 = vpop.f32.mrf.mxu0
    %815 = vmatprep.mubr.bf16.mxu0 0
    %816 = vmatmul.mubr.bf16.gmra.mxu0 %v709
    %v817 = vpop.f32.mrf.mxu0
    %v818 = vadd.f32 0.0, %v817
    %v819 = vpop.f32.mrf.mxu0
    %v820 = vpop.f32.mrf.mxu0
    %v821 = vadd.f32 0.0, %v820
    %v822 = vpop.f32.mrf.mxu0
    %823 = vdwg.mxu0
    %v840 = vunpack.c.l.b16 %v692
    %v841 = vunpack.c.l.b16 %v693
    %v842 = vunpack.c.l.b16 %v694
    %v843 = vunpack.c.l.b16 %v695
    %v844 = vunpack.c.l.b16 %v696
    %v845 = vunpack.c.l.b16 %v697
    %v846 = vunpack.c.l.b16 %v698
    %v847 = vunpack.c.l.b16 %v699
    %v848 = vunpack.c.l.b16 %v700
    %v849 = vunpack.c.l.b16 %v701
    %v850 = vunpack.c.l.b16 %v702
    %v851 = vunpack.c.l.b16 %v703
    %v852 = vunpack.c.l.b16 %v704
    %v853 = vunpack.c.l.b16 %v705
    %v854 = vunpack.c.l.b16 %v706
    %v855 = vunpack.c.l.b16 %v707
    %v856 = vpack.c.b16 %v841, %v840
    %v857 = vpack.c.b16 %v843, %v842
    %v858 = vpack.c.b16 %v845, %v844
    %v859 = vpack.c.b16 %v847, %v846
    %v860 = vpack.c.b16 %v849, %v848
    %v861 = vpack.c.b16 %v851, %v850
    %v862 = vpack.c.b16 %v853, %v852
    %v863 = vpack.c.b16 %v855, %v854
    %872 = vmatprep.subr.bf16.mxu0 0
    %873 = vmatpush1.bf16.msra.mxu0 %v863
    %874 = vmatprep.subr.bf16.mxu0 0
    %875 = vmatpush1.bf16.msra.mxu0 %v862
    %876 = vmatprep.subr.bf16.mxu0 0
    %877 = vmatpush1.bf16.msra.mxu0 %v861
    %878 = vmatprep.subr.bf16.mxu0 0
    %879 = vmatpush1.bf16.msra.mxu0 %v860
    %880 = vmatprep.subr.bf16.mxu0 0
    %881 = vmatpush1.bf16.msra.mxu0 %v859
    %882 = vmatprep.subr.bf16.mxu0 0
    %883 = vmatpush1.bf16.msra.mxu0 %v858
    %884 = vmatprep.subr.bf16.mxu0 0
    %885 = vmatpush1.bf16.msra.mxu0 %v857
    %886 = vmatprep.subr.bf16.mxu0 0
    %887 = vmatpush1.bf16.msra.mxu0 %v856
    %888 = vmatprep.subr.bf16.mxu0 0
    %889 = vmatpush2.bf16.msra.mxu0 0
    %890 = vmatprep.subr.bf16.mxu0 0
    %891 = vmatpush2.bf16.msra.mxu0 0
    %892 = vmatprep.subr.bf16.mxu0 0
    %893 = vmatpush2.bf16.msra.mxu0 0
    %894 = vmatprep.subr.bf16.mxu0 0
    %895 = vmatpush2.bf16.msra.mxu0 0
    %896 = vmatprep.subr.bf16.mxu0 0
    %897 = vmatpush2.bf16.msra.mxu0 0
    %898 = vmatprep.subr.bf16.mxu0 0
    %899 = vmatpush2.bf16.msra.mxu0 0
    %900 = vmatprep.subr.bf16.mxu0 0
    %901 = vmatpush2.bf16.msra.mxu0 0
    %902 = vmatprep.subr.bf16.mxu0 0
    %903 = vmatpush2.bf16.msra.mxu0 0
    %904 = vmatprep.mubr.bf16.mxu0 0
    %905 = vmatmul.mubr.bf16.gmra.mxu0 %v690
    %v906 = vpop.f32.mrf.mxu0
    %v907 = vadd.f32 %v810, %v906
    %v908 = vpop.f32.mrf.mxu0
    %v909 = vpop.f32.mrf.mxu0
    %v910 = vadd.f32 %v813, %v909
    %v911 = vpop.f32.mrf.mxu0
    %912 = vmatprep.mubr.bf16.mxu0 0
    %913 = vmatmul.mubr.bf16.gmra.mxu0 %v691
    %v914 = vpop.f32.mrf.mxu0
    %v915 = vadd.f32 %v818, %v914
    %v916 = vpop.f32.mrf.mxu0
    %v917 = vpop.f32.mrf.mxu0
    %v918 = vadd.f32 %v821, %v917
    %v919 = vpop.f32.mrf.mxu0
    %920 = vdwg.mxu0
    %v921 = vpack.c.bf16 %v687, %v686
    %v922 = vpack.c.bf16 %v689, %v688
    %s923 = scalar_lea.vmem [#allocation8], 128
    %v924 = vld [vmem:[%s923] sm:$0xf]
    %v925 = vld [vmem:[%s923 + $0x4] sm:$0xf]
    %v926 = vld [vmem:[%s923 + $0x8] sm:$0xf]
    %v927 = vld [vmem:[%s923 + $0xc] sm:$0xf]
    %v928 = vld [vmem:[%s923 + $0x10] sm:$0xf]
    %v929 = vld [vmem:[%s923 + $0x14] sm:$0xf]
    %v930 = vld [vmem:[%s923 + $0x18] sm:$0xf]
    %v931 = vld [vmem:[%s923 + $0x1c] sm:$0xf]
    %v932 = vld [vmem:[%s923 + $0x20] sm:$0xf]
    %v933 = vld [vmem:[%s923 + $0x24] sm:$0xf]
    %v934 = vld [vmem:[%s923 + $0x28] sm:$0xf]
    %v935 = vld [vmem:[%s923 + $0x2c] sm:$0xf]
    %v936 = vld [vmem:[%s923 + $0x30] sm:$0xf]
    %v937 = vld [vmem:[%s923 + $0x34] sm:$0xf]
    %v938 = vld [vmem:[%s923 + $0x38] sm:$0xf]
    %v939 = vld [vmem:[%s923 + $0x3c] sm:$0xf]
    %v956 = vunpack.c.l.b16 %v924
    %v957 = vunpack.c.l.b16 %v925
    %v958 = vunpack.c.l.b16 %v926
    %v959 = vunpack.c.l.b16 %v927
    %v960 = vunpack.c.l.b16 %v928
    %v961 = vunpack.c.l.b16 %v929
    %v962 = vunpack.c.l.b16 %v930
    %v963 = vunpack.c.l.b16 %v931
    %v964 = vunpack.c.l.b16 %v932
    %v965 = vunpack.c.l.b16 %v933
    %v966 = vunpack.c.l.b16 %v934
    %v967 = vunpack.c.l.b16 %v935
    %v968 = vunpack.c.l.b16 %v936
    %v969 = vunpack.c.l.b16 %v937
    %v970 = vunpack.c.l.b16 %v938
    %v971 = vunpack.c.l.b16 %v939
    %v972 = vpack.c.b16 %v957, %v956
    %v973 = vpack.c.b16 %v959, %v958
    %v974 = vpack.c.b16 %v961, %v960
    %v975 = vpack.c.b16 %v963, %v962
    %v976 = vpack.c.b16 %v965, %v964
    %v977 = vpack.c.b16 %v967, %v966
    %v978 = vpack.c.b16 %v969, %v968
    %v979 = vpack.c.b16 %v971, %v970
    %988 = vmatprep.subr.bf16.mxu0 0
    %989 = vmatpush1.bf16.msra.mxu0 %v979
    %990 = vmatprep.subr.bf16.mxu0 0
    %991 = vmatpush1.bf16.msra.mxu0 %v978
    %992 = vmatprep.subr.bf16.mxu0 0
    %993 = vmatpush1.bf16.msra.mxu0 %v977
    %994 = vmatprep.subr.bf16.mxu0 0
    %995 = vmatpush1.bf16.msra.mxu0 %v976
    %996 = vmatprep.subr.bf16.mxu0 0
    %997 = vmatpush1.bf16.msra.mxu0 %v975
    %998 = vmatprep.subr.bf16.mxu0 0
    %999 = vmatpush1.bf16.msra.mxu0 %v974
    %1000 = vmatprep.subr.bf16.mxu0 0
    %1001 = vmatpush1.bf16.msra.mxu0 %v973
    %1002 = vmatprep.subr.bf16.mxu0 0
    %1003 = vmatpush1.bf16.msra.mxu0 %v972
    %1004 = vmatprep.subr.bf16.mxu0 0
    %1005 = vmatpush2.bf16.msra.mxu0 0
    %1006 = vmatprep.subr.bf16.mxu0 0
    %1007 = vmatpush2.bf16.msra.mxu0 0
    %1008 = vmatprep.subr.bf16.mxu0 0
    %1009 = vmatpush2.bf16.msra.mxu0 0
    %1010 = vmatprep.subr.bf16.mxu0 0
    %1011 = vmatpush2.bf16.msra.mxu0 0
    %1012 = vmatprep.subr.bf16.mxu0 0
    %1013 = vmatpush2.bf16.msra.mxu0 0
    %1014 = vmatprep.subr.bf16.mxu0 0
    %1015 = vmatpush2.bf16.msra.mxu0 0
    %1016 = vmatprep.subr.bf16.mxu0 0
    %1017 = vmatpush2.bf16.msra.mxu0 0
    %1018 = vmatprep.subr.bf16.mxu0 0
    %1019 = vmatpush2.bf16.msra.mxu0 0
    %1020 = vmatprep.mubr.bf16.mxu0 0
    %1021 = vmatmul.mubr.bf16.gmra.mxu0 %v921
    %v1022 = vpop.f32.mrf.mxu0
    %v1023 = vadd.f32 0.0, %v1022
    %v1024 = vpop.f32.mrf.mxu0
    %v1025 = vpop.f32.mrf.mxu0
    %v1026 = vadd.f32 0.0, %v1025
    %v1027 = vpop.f32.mrf.mxu0
    %1028 = vmatprep.mubr.bf16.mxu0 0
    %1029 = vmatmul.mubr.bf16.gmra.mxu0 %v922
    %v1030 = vpop.f32.mrf.mxu0
    %v1031 = vadd.f32 0.0, %v1030
    %v1032 = vpop.f32.mrf.mxu0
    %v1033 = vpop.f32.mrf.mxu0
    %v1034 = vadd.f32 0.0, %v1033
    %v1035 = vpop.f32.mrf.mxu0
    %1036 = vdwg.mxu0
    %v1037 = vadd.f32 %v907, %v1023
    %v1038 = vadd.f32 %v910, %v1026
    %v1039 = vadd.f32 %v915, %v1031
    %v1040 = vadd.f32 %v918, %v1034
    %v1041 = vld [vmem:[%s6] sm:$0x1]
    %v1042 = vld [vmem:[%s7] sm:$0x1]
    %v1043 = vadd.f32 %v1037, %v1038
    %v1044 = vadd.f32 %v1043, %v1039
    %v1045 = vadd.f32 %v1044, %v1040
    %v1046 = vrot.slane %v1045, 4
    %v1047 = vadd.f32 %v1045, %v1046
    %v1048 = vrot.slane %v1047, 2
    %v1049 = vadd.f32 %v1047, %v1048
    %v1050 = vrot.slane %v1049, 1
    %v1051 = vadd.f32 %v1049, %v1050
    %v1052 = vmul.f32 %v1037, %v1037
    %v1053 = vmul.f32 %v1038, %v1038
    %v1054 = vmul.f32 %v1039, %v1039
    %v1055 = vmul.f32 %v1040, %v1040
    %v1056 = vadd.f32 %v1052, %v1053
    %v1057 = vadd.f32 %v1056, %v1054
    %v1058 = vadd.f32 %v1057, %v1055
    %v1059 = vrot.slane %v1058, 4
    %v1060 = vadd.f32 %v1058, %v1059
    %v1061 = vrot.slane %v1060, 2
    %v1062 = vadd.f32 %v1060, %v1061
    %v1063 = vrot.slane %v1062, 1
    %v1064 = vadd.f32 %v1062, %v1063
    %v1065 = vsel %vm533, %v1051, %v1064
    %1066 = vmatprep.subr.mxu0 0.0
    %1067 = vmatpush1.msra.mxu0 %v131
    %1068 = vmatprep.subr.mxu0 0.0
    %1069 = vmatpush1.msra.mxu0 %v130
    %1070 = vmatprep.subr.mxu0 0.0
    %1071 = vmatpush1.msra.mxu0 %v129
    %1072 = vmatprep.subr.mxu0 0.0
    %1073 = vmatpush1.msra.mxu0 %v128
    %1074 = vmatprep.subr.mxu0 0.0
    %1075 = vmatpush1.msra.mxu0 %v127
    %1076 = vmatprep.subr.mxu0 0.0
    %1077 = vmatpush1.msra.mxu0 %v126
    %1078 = vmatprep.subr.mxu0 0.0
    %1079 = vmatpush1.msra.mxu0 %v125
    %1080 = vmatprep.subr.mxu0 0.0
    %1081 = vmatpush1.msra.mxu0 %v124
    %1082 = vmatprep.subr.mxu0 0.0
    %1083 = vmatpush1.msra.mxu0 %v123
    %1084 = vmatprep.subr.mxu0 0.0
    %1085 = vmatpush1.msra.mxu0 %v122
    %1086 = vmatprep.subr.mxu0 0.0
    %1087 = vmatpush1.msra.mxu0 %v121
    %1088 = vmatprep.subr.mxu0 0.0
    %1089 = vmatpush1.msra.mxu0 %v120
    %1090 = vmatprep.subr.mxu0 0.0
    %1091 = vmatpush1.msra.mxu0 %v119
    %1092 = vmatprep.subr.mxu0 0.0
    %1093 = vmatpush1.msra.mxu0 %v118
    %1094 = vmatprep.subr.mxu0 0.0
    %1095 = vmatpush1.msra.mxu0 %v117
    %1096 = vmatprep.subr.mxu0 0.0
    %1097 = vmatpush1.msra.mxu0 %v116
    %1098 = vmatprep.subr.mxu0 0.0
    %1099 = vmatpush2.msra.mxu0 0.0
    %1100 = vmatprep.subr.mxu0 0.0
    %1101 = vmatpush2.msra.mxu0 0.0
    %1102 = vmatprep.subr.mxu0 0.0
    %1103 = vmatpush2.msra.mxu0 0.0
    %1104 = vmatprep.subr.mxu0 0.0
    %1105 = vmatpush2.msra.mxu0 0.0
    %1106 = vmatprep.subr.mxu0 0.0
    %1107 = vmatpush2.msra.mxu0 0.0
    %1108 = vmatprep.subr.mxu0 0.0
    %1109 = vmatpush2.msra.mxu0 0.0
    %1110 = vmatprep.subr.mxu0 0.0
    %1111 = vmatpush2.msra.mxu0 0.0
    %1112 = vmatprep.subr.mxu0 0.0
    %1113 = vmatpush2.msra.mxu0 0.0
    %1114 = vmatprep.subr.mxu0 0.0
    %1115 = vmatpush2.msra.mxu0 0.0
    %1116 = vmatprep.subr.mxu0 0.0
    %1117 = vmatpush2.msra.mxu0 0.0
    %1118 = vmatprep.subr.mxu0 0.0
    %1119 = vmatpush2.msra.mxu0 0.0
    %1120 = vmatprep.subr.mxu0 0.0
    %1121 = vmatpush2.msra.mxu0 0.0
    %1122 = vmatprep.subr.mxu0 0.0
    %1123 = vmatpush2.msra.mxu0 0.0
    %1124 = vmatprep.subr.mxu0 0.0
    %1125 = vmatpush2.msra.mxu0 0.0
    %1126 = vmatprep.subr.mxu0 0.0
    %1127 = vmatpush2.msra.mxu0 0.0
    %1128 = vmatprep.subr.mxu0 0.0
    %1129 = vmatpush2.msra.mxu0 0.0
    %1130 = vmatprep.mubr.f32.mxu0 0.0
    %1131 = vmatmul.mubr.f32.gmra.mxu0 %v1065
    %v1132 = vpop.f32.mrf.mxu0
    %v1133 = vadd.f32 0.0, %v1132
    %v1134 = vpop.f32.mrf.mxu0
    %1135 = vdwg.mxu0
    %v1136 = vmul.f32 %v1133, %v1133
    %v1138 = vrot.slane %v1136, 7
    %v1140 = vsub.f32 %v1133, %v1138
    %v1141 = vadd.f32 %v1140, 1e-05
    %v1142 = vrsqrt.pop %v1141
    %v1145 = vunpack.c.l.s4 1966171168
    %v1146 = vunpack.c.0.s8 %v1145
    %v1147 = vlaneseq
    %v1148 = vshrl.u32 %v1147, 7
    %v1149 = vsub.s32 %v1146, %v1148
    %v1150 = vrot.slane %v1142, %v1149
    %v1151 = vcombine.high %v1150, %v1150
    %v1153 = vunpack.c.l.s4 1966171168
    %v1154 = vunpack.c.0.s8 %v1153
    %v1155 = vlaneseq
    %v1156 = vshrl.u32 %v1155, 7
    %v1157 = vsub.s32 %v1154, %v1156
    %v1158 = vrot.slane %v1151, %v1157
    %v1160 = vmul.f32 %v1041, %v1158
    %v1162 = vlaneseq
    %v1163 = vshrl.u32 %v1162, 7
    %v1164 = vsub.s32 0, %v1163
    %v1165 = vrot.slane %v1160, %v1164
    %v1167 = vmul.f32 %v1037, %v1165
    %v1168 = vmul.f32 %v1038, %v1165
    %v1169 = vmul.f32 %v1039, %v1165
    %v1170 = vmul.f32 %v1040, %v1165
    %v1171 = vmul.f32 %v1133, %v1160
    %v1172 = vsub.f32 %v1042, %v1171
    %v1174 = vlaneseq
    %v1175 = vshrl.u32 %v1174, 7
    %v1176 = vsub.s32 0, %v1175
    %v1177 = vrot.slane %v1172, %v1176
    %v1179 = vadd.f32 %v1167, %v1177
    %v1180 = vadd.f32 %v1168, %v1177
    %v1181 = vadd.f32 %v1169, %v1177
    %v1182 = vadd.f32 %v1170, %v1177
    %v1183 = vld [vmem:[#allocation9] sm:$0xf]
    %v1184 = vld [vmem:[#allocation9 + $0x4] sm:$0xf]
    %v1185 = vld [vmem:[#allocation9 + $0x8] sm:$0xf]
    %v1186 = vld [vmem:[#allocation9 + $0xc] sm:$0xf]
    %v1187 = vld [vmem:[#allocation9 + $0x10] sm:$0xf]
    %v1188 = vld [vmem:[#allocation9 + $0x14] sm:$0xf]
    %v1189 = vld [vmem:[#allocation9 + $0x18] sm:$0xf]
    %v1190 = vld [vmem:[#allocation9 + $0x1c] sm:$0xf]
    %v1199 = vunpack.c.l.b16 %v1183
    %v1200 = vunpack.c.l.b16 %v1184
    %v1201 = vunpack.c.l.b16 %v1185
    %v1202 = vunpack.c.l.b16 %v1186
    %v1203 = vunpack.c.l.b16 %v1187
    %v1204 = vunpack.c.l.b16 %v1188
    %v1205 = vunpack.c.l.b16 %v1189
    %v1206 = vunpack.c.l.b16 %v1190
    %v1207 = vpack.c.b16 %v1200, %v1199
    %v1208 = vpack.c.b16 %v1202, %v1201
    %v1209 = vpack.c.b16 %v1204, %v1203
    %v1210 = vpack.c.b16 %v1206, %v1205
    %1215 = vmatprep.subr.bf16.mxu0 0
    %1216 = vmatpush1.bf16.msra.mxu0 0
    %1217 = vmatprep.subr.bf16.mxu0 0
    %1218 = vmatpush1.bf16.msra.mxu0 0
    %1219 = vmatprep.subr.bf16.mxu0 0
    %1220 = vmatpush1.bf16.msra.mxu0 0
    %1221 = vmatprep.subr.bf16.mxu0 0
    %1222 = vmatpush1.bf16.msra.mxu0 0
    %1223 = vmatprep.subr.bf16.mxu0 0
    %1224 = vmatpush1.bf16.msra.mxu0 %v1210
    %1225 = vmatprep.subr.bf16.mxu0 0
    %1226 = vmatpush1.bf16.msra.mxu0 %v1209
    %1227 = vmatprep.subr.bf16.mxu0 0
    %1228 = vmatpush1.bf16.msra.mxu0 %v1208
    %1229 = vmatprep.subr.bf16.mxu0 0
    %1230 = vmatpush1.bf16.msra.mxu0 %v1207
    %1231 = vmatprep.subr.bf16.mxu0 0
    %1232 = vmatpush2.bf16.msra.mxu0 0
    %1233 = vmatprep.subr.bf16.mxu0 0
    %1234 = vmatpush2.bf16.msra.mxu0 0
    %1235 = vmatprep.subr.bf16.mxu0 0
    %1236 = vmatpush2.bf16.msra.mxu0 0
    %1237 = vmatprep.subr.bf16.mxu0 0
    %1238 = vmatpush2.bf16.msra.mxu0 0
    %1239 = vmatprep.subr.bf16.mxu0 0
    %1240 = vmatpush2.bf16.msra.mxu0 0
    %1241 = vmatprep.subr.bf16.mxu0 0
    %1242 = vmatpush2.bf16.msra.mxu0 0
    %1243 = vmatprep.subr.bf16.mxu0 0
    %1244 = vmatpush2.bf16.msra.mxu0 0
    %1245 = vmatprep.subr.bf16.mxu0 0
    %1246 = vmatpush2.bf16.msra.mxu0 0
    %1247 = vmatprep.mubr.bf16.mxu0 0
    %1248 = vmatmul.mubr.bf16.gmra.mxu0 %v282
    %v1249 = vpop.f32.mrf.mxu0
    %v1250 = vadd.f32 0.0, %v1249
    %v1251 = vpop.f32.mrf.mxu0
    %v1252 = vpop.f32.mrf.mxu0
    %v1253 = vadd.f32 0.0, %v1252
    %v1254 = vpop.f32.mrf.mxu0
    %1255 = vmatprep.mubr.bf16.mxu0 0
    %1256 = vmatmul.mubr.bf16.gmra.mxu0 %v285
    %v1257 = vpop.f32.mrf.mxu0
    %v1258 = vadd.f32 0.0, %v1257
    %v1259 = vpop.f32.mrf.mxu0
    %v1260 = vpop.f32.mrf.mxu0
    %v1261 = vadd.f32 0.0, %v1260
    %v1262 = vpop.f32.mrf.mxu0
    %1263 = vdwg.mxu0
    %v1264 = vld [vmem:[%s8] sm:$0x1]
    %v1265 = vld [vmem:[%s9] sm:$0x1]
    %v1266 = vadd.f32 %v1250, %v1253
    %v1267 = vadd.f32 %v1266, %v1258
    %v1268 = vadd.f32 %v1267, %v1261
    %v1269 = vrot.slane %v1268, 4
    %v1270 = vadd.f32 %v1268, %v1269
    %v1271 = vrot.slane %v1270, 2
    %v1272 = vadd.f32 %v1270, %v1271
    %v1273 = vrot.slane %v1272, 1
    %v1274 = vadd.f32 %v1272, %v1273
    %v1275 = vmul.f32 %v1250, %v1250
    %v1276 = vmul.f32 %v1253, %v1253
    %v1277 = vmul.f32 %v1258, %v1258
    %v1278 = vmul.f32 %v1261, %v1261
    %v1279 = vadd.f32 %v1275, %v1276
    %v1280 = vadd.f32 %v1279, %v1277
    %v1281 = vadd.f32 %v1280, %v1278
    %v1282 = vrot.slane %v1281, 4
    %v1283 = vadd.f32 %v1281, %v1282
    %v1284 = vrot.slane %v1283, 2
    %v1285 = vadd.f32 %v1283, %v1284
    %v1286 = vrot.slane %v1285, 1
    %v1287 = vadd.f32 %v1285, %v1286
    %v1288 = vsel %vm533, %v1274, %v1287
    %1289 = vmatprep.subr.mxu0 0.0
    %1290 = vmatpush1.msra.mxu0 %v131
    %1291 = vmatprep.subr.mxu0 0.0
    %1292 = vmatpush1.msra.mxu0 %v130
    %1293 = vmatprep.subr.mxu0 0.0
    %1294 = vmatpush1.msra.mxu0 %v129
    %1295 = vmatprep.subr.mxu0 0.0
    %1296 = vmatpush1.msra.mxu0 %v128
    %1297 = vmatprep.subr.mxu0 0.0
    %1298 = vmatpush1.msra.mxu0 %v127
    %1299 = vmatprep.subr.mxu0 0.0
    %1300 = vmatpush1.msra.mxu0 %v126
    %1301 = vmatprep.subr.mxu0 0.0
    %1302 = vmatpush1.msra.mxu0 %v125
    %1303 = vmatprep.subr.mxu0 0.0
    %1304 = vmatpush1.msra.mxu0 %v124
    %1305 = vmatprep.subr.mxu0 0.0
    %1306 = vmatpush1.msra.mxu0 %v123
    %1307 = vmatprep.subr.mxu0 0.0
    %1308 = vmatpush1.msra.mxu0 %v122
    %1309 = vmatprep.subr.mxu0 0.0
    %1310 = vmatpush1.msra.mxu0 %v121
    %1311 = vmatprep.subr.mxu0 0.0
    %1312 = vmatpush1.msra.mxu0 %v120
    %1313 = vmatprep.subr.mxu0 0.0
    %1314 = vmatpush1.msra.mxu0 %v119
    %1315 = vmatprep.subr.mxu0 0.0
    %1316 = vmatpush1.msra.mxu0 %v118
    %1317 = vmatprep.subr.mxu0 0.0
    %1318 = vmatpush1.msra.mxu0 %v117
    %1319 = vmatprep.subr.mxu0 0.0
    %1320 = vmatpush1.msra.mxu0 %v116
    %1321 = vmatprep.subr.mxu0 0.0
    %1322 = vmatpush2.msra.mxu0 0.0
    %1323 = vmatprep.subr.mxu0 0.0
    %1324 = vmatpush2.msra.mxu0 0.0
    %1325 = vmatprep.subr.mxu0 0.0
    %1326 = vmatpush2.msra.mxu0 0.0
    %1327 = vmatprep.subr.mxu0 0.0
    %1328 = vmatpush2.msra.mxu0 0.0
    %1329 = vmatprep.subr.mxu0 0.0
    %1330 = vmatpush2.msra.mxu0 0.0
    %1331 = vmatprep.subr.mxu0 0.0
    %1332 = vmatpush2.msra.mxu0 0.0
    %1333 = vmatprep.subr.mxu0 0.0
    %1334 = vmatpush2.msra.mxu0 0.0
    %1335 = vmatprep.subr.mxu0 0.0
    %1336 = vmatpush2.msra.mxu0 0.0
    %1337 = vmatprep.subr.mxu0 0.0
    %1338 = vmatpush2.msra.mxu0 0.0
    %1339 = vmatprep.subr.mxu0 0.0
    %1340 = vmatpush2.msra.mxu0 0.0
    %1341 = vmatprep.subr.mxu0 0.0
    %1342 = vmatpush2.msra.mxu0 0.0
    %1343 = vmatprep.subr.mxu0 0.0
    %1344 = vmatpush2.msra.mxu0 0.0
    %1345 = vmatprep.subr.mxu0 0.0
    %1346 = vmatpush2.msra.mxu0 0.0
    %1347 = vmatprep.subr.mxu0 0.0
    %1348 = vmatpush2.msra.mxu0 0.0
    %1349 = vmatprep.subr.mxu0 0.0
    %1350 = vmatpush2.msra.mxu0 0.0
    %1351 = vmatprep.subr.mxu0 0.0
    %1352 = vmatpush2.msra.mxu0 0.0
    %1353 = vmatprep.mubr.f32.mxu0 0.0
    %1354 = vmatmul.mubr.f32.gmra.mxu0 %v1288
    %v1355 = vpop.f32.mrf.mxu0
    %v1356 = vadd.f32 0.0, %v1355
    %v1357 = vpop.f32.mrf.mxu0
    %1358 = vdwg.mxu0
    %v1359 = vmul.f32 %v1356, %v1356
    %v1361 = vrot.slane %v1359, 7
    %v1363 = vsub.f32 %v1356, %v1361
    %v1364 = vadd.f32 %v1363, 1e-05
    %v1365 = vrsqrt.pop %v1364
    %v1368 = vunpack.c.l.s4 1966171168
    %v1369 = vunpack.c.0.s8 %v1368
    %v1370 = vlaneseq
    %v1371 = vshrl.u32 %v1370, 7
    %v1372 = vsub.s32 %v1369, %v1371
    %v1373 = vrot.slane %v1365, %v1372
    %v1374 = vcombine.high %v1373, %v1373
    %v1376 = vunpack.c.l.s4 1966171168
    %v1377 = vunpack.c.0.s8 %v1376
    %v1378 = vlaneseq
    %v1379 = vshrl.u32 %v1378, 7
    %v1380 = vsub.s32 %v1377, %v1379
    %v1381 = vrot.slane %v1374, %v1380
    %v1383 = vmul.f32 %v1264, %v1381
    %v1385 = vlaneseq
    %v1386 = vshrl.u32 %v1385, 7
    %v1387 = vsub.s32 0, %v1386
    %v1388 = vrot.slane %v1383, %v1387
    %v1390 = vmul.f32 %v1250, %v1388
    %v1391 = vmul.f32 %v1253, %v1388
    %v1392 = vmul.f32 %v1258, %v1388
    %v1393 = vmul.f32 %v1261, %v1388
    %v1394 = vmul.f32 %v1356, %v1383
    %v1395 = vsub.f32 %v1265, %v1394
    %v1397 = vlaneseq
    %v1398 = vshrl.u32 %v1397, 7
    %v1399 = vsub.s32 0, %v1398
    %v1400 = vrot.slane %v1395, %v1399
    %v1402 = vadd.f32 %v1390, %v1400
    %v1403 = vadd.f32 %v1391, %v1400
    %v1404 = vadd.f32 %v1392, %v1400
    %v1405 = vadd.f32 %v1393, %v1400
    %v1406 = vadd.f32 %v1179, %v1402
    %v1407 = vadd.f32 %v1180, %v1403
    %v1408 = vadd.f32 %v1181, %v1404
    %v1409 = vadd.f32 %v1182, %v1405
    %v1410 = vmax.f32 %v1406, 0.0
    %v1411 = vmax.f32 %v1407, 0.0
    %v1412 = vmax.f32 %v1408, 0.0
    %v1413 = vmax.f32 %v1409, 0.0
    %1414 = vst [vmem:[#allocation12] sm:$0xff] %v1410
    %1415 = vst [vmem:[#allocation12 + $0x8] sm:$0xff] %v1411
    %1416 = vst [vmem:[#allocation12 + $0x10] sm:$0xff] %v1412
    %1417 = vst [vmem:[#allocation12 + $0x18] sm:$0xff] %v1413
    // Predicated region
    $region70: #{tpu_custom_call.1} parent=1 // pred_check
      _
    $region71: #{tpu_custom_call.1} parent=1 // pred_check_branch
      %1419 = sbr.rel (0) target = $region73
    $region72: #{tpu_custom_call.1} parent=1 // pred_region
      %s1421 = ssub.s32 512, 512
      %1422 = vsyncadd [#allocation5], %s1421
      %s1423 = sshll.u32 [#allocation12], 4
      %s1424 = int_to_ptr.vmem [resolvable:$true] %s1423
      %1429 = dma.vmem_to_hbm [thread:$0]  %s1424, 512, %s12, [#allocation5], 128, 128, 8
    $region73: #{tpu_custom_call.1} parent=1 // pred_fallthru
      _
    // Predicated region
    $region74: #{tpu_custom_call.1} parent=1 // pred_check
      _
    $region75: #{tpu_custom_call.1} parent=1 // pred_check_branch
      %1431 = sbr.rel (0) target = $region77
    $region76: #{tpu_custom_call.1} parent=1 // pred_region
      %1432 = dma.done [#allocation5], 512
    $region77: #{tpu_custom_call.1} parent=1 // pred_fallthru
      _
    %1433 = vsyncpa [#allocation4], 1
    %1434 = vsyncpa [#allocation7], 1
    %1435 = vsyncpa [#allocation10], 1
    %1436 = vsyncpa [#allocation5], 1

</llo_original>
